<compile_context>
chip_gen: v7x
topology: tpu7x:2x2x1
jax: 0.10.0
libtpu: 0.0.40
codegen_flags: <defaults>
</compile_context>

<pallas_src>
import jax
import jax.numpy as jnp
from jax import lax
from jax.experimental import pallas as pl
from jax.experimental.pallas import tpu as pltpu


def _round_up(x, m):
    return (x + m - 1) // m * m


def _choose_tile_h(h, w, kf_p, cout_s, budget_bytes=12 * 1024 * 1024):
    """Largest divisor of h whose per-step working set fits the VMEM budget."""
    for th in range(h, 0, -1):
        if h % th:
            continue
        ls = (th + 2) * (w + 2)
        lt = th * (w + 2)
        need = (2 * kf_p * ls * 2        # folded x tile, bf16, double-buffered
                + 2 * cout_s * lt * 2    # y tile, bf16, double-buffered
                + cout_s * lt * 4        # f32 accumulator
                + 3 * cout_s * kf_p * 2)  # weights
        if need <= budget_bytes:
            return th
    return 1


def conv_stats_kernel(x_ref, w_ref, b_ref, mask_ref, y_ref, ssum_ref, ssq_ref):
    """Implicit-GEMM 3x3 conv tile (3 MXU dots, K = 3*Cin_p) + bias, emitting a
    bf16 y^T tile and per-channel masked sum / sum-of-squares for BatchNorm."""
    # x_ref   : (1, 1, Kf_p, Ls)   bf16  dx-folded, channels-first, flat spatial
    # w_ref   : (3, Cout_s, Kf_p)  bf16  one weight matrix per dy
    # b_ref   : (Cout_s, 1)        f32
    # mask_ref: (1, Lt)            f32   1.0 on valid (non-pad) output columns
    # y_ref   : (1, 1, Cout_s, Lt) bf16
    # ssum/ssq: (1, 1, Cout_s, 1)  f32
    lt = y_ref.shape[-1]
    row = (x_ref.shape[-1] - lt) // 2          # = W + 2 (padded row stride)
    cout_s = y_ref.shape[-2]

    slab = x_ref[0, 0]                          # (Kf_p, Ls) bf16
    acc = jnp.zeros((cout_s, lt), jnp.float32)
    # 3 chained MXU dots; the dy shift is a static lane-offset window of the
    # slab (Mosaic lane shift / XLU, co-issues with the MXU).
    # TODO(synk): for very large tiles, accumulate into a VMEM scratch instead
    # of a live f32 value to bound register pressure.
    for dy in range(3):
        xs = slab[:, dy * row: dy * row + lt]   # (Kf_p, Lt)
        acc = acc + jnp.dot(w_ref[dy], xs, preferred_element_type=jnp.float32)

    # f32 per-channel stats on the PRE-bias activation (bias is re-added to the
    # mean outside; variance is shift-invariant -> better conditioning).
    m = mask_ref[...]                           # (1, Lt), zeroes the pad columns
    ym = acc * m
    ssum_ref[0, 0] = jnp.sum(ym, axis=-1, keepdims=True)
    ssq_ref[0, 0] = jnp.sum(ym * acc, axis=-1, keepdims=True)

    # bf16, unpadded-Cout interchange tensor (stats already captured in f32).
    y_ref[0, 0] = (acc + b_ref[...]).astype(y_ref.dtype)


def bn_relu_kernel(y_ref, scale_ref, shift_ref, o_ref):
    """BatchNorm affine + ReLU on the transposed (Cout_s, Lt) tile: scale/shift
    are (Cout_s, 1) lane-broadcasts; no transpose needed."""
    z = y_ref[0, 0].astype(jnp.float32) * scale_ref[...] + shift_ref[...]
    o_ref[0, 0] = jnp.maximum(z, 0.0).astype(o_ref.dtype)


def conv_block_forward(x_nchw, weight, bias, gamma, beta, eps=1e-5):
    N, Cin, H, W = x_nchw.shape
    Cout = weight.shape[0]
    row = W + 2
    P = (H + 2) * row

    Cout_s = _round_up(Cout, 8)          # sublane-aligned output-channel dim
    Kf = 3 * Cin                         # dx-folded contraction depth
    Kf_p = _round_up(Kf, 16)             # bf16 sublane packing of the MXU RHS

    TH = _choose_tile_h(H, W, Kf_p, Cout_s)
    n_ht = H // TH
    Ls = (TH + 2) * row                  # input span per tile (2-row halo)
    Lt = TH * row                        # output positions per tile

    # ---- dx-folded, channels-first, flattened-spatial input ----------------
    xpad = jnp.pad(x_nchw.astype(jnp.float32), ((0, 0), (0, 0), (1, 1), (1, 1)))
    xflat = xpad.reshape(N, Cin, P)
    x_l = jnp.pad(xflat, ((0, 0), (0, 0), (1, 0)))[:, :, :P]   # p -> p-1 (dx=0)
    x_r = jnp.pad(xflat, ((0, 0), (0, 0), (0, 1)))[:, :, 1:]   # p -> p+1 (dx=2)
    xfold = jnp.concatenate([x_l, xflat, x_r], axis=1)         # (N, 3*Cin, P)
    xfold = jnp.pad(xfold, ((0, 0), (0, Kf_p - Kf), (0, 0))).astype(jnp.bfloat16)
    # Overlapping (halo'd) row tiles are contiguous slices of the flat axis;
    # duplicating the 2 halo rows per tile keeps the BlockSpec pipeline simple.
    x_tiles = jnp.stack(
        [xfold[:, :, t * TH * row: t * TH * row + Ls] for t in range(n_ht)],
        axis=1)                                                # (N, n_ht, Kf_p, Ls)

    # ---- weights: (Cout, Cin, 3, 3) -> per-dy (Cout_s, Kf_p) matrices ------
    w1 = jnp.transpose(weight.astype(jnp.float32), (2, 3, 1, 0))    # (dy,dx,Cin,Cout)
    w2 = jnp.transpose(w1, (0, 3, 1, 2)).reshape(3, Cout, Kf)       # [dy,co,dx*Cin+c]
    wmat = jnp.pad(w2, ((0, 0), (0, Cout_s - Cout), (0, Kf_p - Kf))
                   ).astype(jnp.bfloat16)

    b_col = jnp.pad(bias.astype(jnp.float32), (0, Cout_s - Cout)).reshape(Cout_s, 1)

    # Valid-column mask: each flattened row carries 2 horizontal pad columns.
    col = jnp.arange(Lt, dtype=jnp.int32) % row
    mask = ((col >= 1) & (col <= W)).astype(jnp.float32).reshape(1, Lt)

    vmem_est = (2 * Kf_p * Ls * 2 + 2 * Cout_s * Lt * 2 + Cout_s * Lt * 4
                + 3 * Cout_s * Kf_p * 2 + 8 * Cout_s * 4)
    vmem_limit = int(min(48 * 2**20, max(16 * 2**20, 4 * vmem_est)))

    grid = (N, n_ht)
    # TODO(synk): on v7x, verify both TensorCores are used by the "parallel"
    # axes; if one TC idles, switch the leading axis to pltpu.CORE_PARALLEL.
    dimsem = ("parallel", "parallel")

    y, ssum, ssq = pl.pallas_call(
        conv_stats_kernel,
        out_shape=(jax.ShapeDtypeStruct((N, n_ht, Cout_s, Lt), jnp.bfloat16),
                   jax.ShapeDtypeStruct((N, n_ht, Cout_s, 1), jnp.float32),
                   jax.ShapeDtypeStruct((N, n_ht, Cout_s, 1), jnp.float32)),
        grid_spec=pltpu.PrefetchScalarGridSpec(
            num_scalar_prefetch=0,
            grid=grid,
            in_specs=[pl.BlockSpec((1, 1, Kf_p, Ls), lambda n, t: (n, t, 0, 0)),
                      pl.BlockSpec((3, Cout_s, Kf_p), lambda n, t: (0, 0, 0)),
                      pl.BlockSpec((Cout_s, 1), lambda n, t: (0, 0)),
                      pl.BlockSpec((1, Lt), lambda n, t: (0, 0))],
            out_specs=[pl.BlockSpec((1, 1, Cout_s, Lt), lambda n, t: (n, t, 0, 0)),
                       pl.BlockSpec((1, 1, Cout_s, 1), lambda n, t: (n, t, 0, 0)),
                       pl.BlockSpec((1, 1, Cout_s, 1), lambda n, t: (n, t, 0, 0))]),
        compiler_params=pltpu.CompilerParams(
            dimension_semantics=dimsem, vmem_limit_bytes=vmem_limit),
    )(x_tiles, wmat, b_col, mask)

    # ---- BatchNorm2d training-mode statistics (f32, biased over N*H*W) -----
    cnt = jnp.float32(N * H * W)
    mean0 = jnp.sum(ssum, axis=(0, 1)) / cnt                 # pre-bias mean
    var = jnp.maximum(jnp.sum(ssq, axis=(0, 1)) / cnt - mean0 * mean0, 0.0)
    mean = mean0 + b_col                                     # re-add conv bias
    inv_std = lax.rsqrt(var + eps)
    g_col = jnp.pad(gamma.astype(jnp.float32), (0, Cout_s - Cout),
                    constant_values=1.0).reshape(Cout_s, 1)
    be_col = jnp.pad(beta.astype(jnp.float32), (0, Cout_s - Cout)).reshape(Cout_s, 1)
    scale = g_col * inv_std
    shift = be_col - mean * scale

    out = pl.pallas_call(
        bn_relu_kernel,
        out_shape=jax.ShapeDtypeStruct((N, n_ht, Cout_s, Lt), jnp.float32),
        grid_spec=pltpu.PrefetchScalarGridSpec(
            num_scalar_prefetch=0,
            grid=grid,
            in_specs=[pl.BlockSpec((1, 1, Cout_s, Lt), lambda n, t: (n, t, 0, 0)),
                      pl.BlockSpec((Cout_s, 1), lambda n, t: (0, 0)),
                      pl.BlockSpec((Cout_s, 1), lambda n, t: (0, 0))],
            out_specs=pl.BlockSpec((1, 1, Cout_s, Lt), lambda n, t: (n, t, 0, 0))),
        compiler_params=pltpu.CompilerParams(
            dimension_semantics=dimsem, vmem_limit_bytes=vmem_limit),
    )(y, scale, shift)

    # (N, n_ht, Cout_s, TH*(W+2)) -> NCHW; drop channel padding and the two
    # horizontal pad columns carried per row (for n_ht == 1 the transpose is a
    # pure-metadata no-op).
    out = out.reshape(N, n_ht, Cout_s, TH, row)
    out = jnp.transpose(out, (0, 2, 1, 3, 4)).reshape(N, Cout_s, H, row)
    return out[:, :Cout, :, 1:W + 1]


def _reference(x_nchw, weight, bias, gamma, beta, eps=1e-5):
    """Pure-JAX f32 reference: conv2d + training-mode BN + ReLU (NCHW)."""
    y = lax.conv_general_dilated(
        x_nchw.astype(jnp.float32), weight.astype(jnp.float32),
        window_strides=(1, 1), padding=((1, 1), (1, 1)),
        dimension_numbers=("NCHW", "OIHW", "NCHW"))
    y = y + bias.reshape(1, -1, 1, 1)
    mean = jnp.mean(y, axis=(0, 2, 3), keepdims=True)
    var = jnp.mean((y - mean) ** 2, axis=(0, 2, 3), keepdims=True)
    y = (y - mean) * lax.rsqrt(var + eps)
    y = y * gamma.reshape(1, -1, 1, 1) + beta.reshape(1, -1, 1, 1)
    return jnp.maximum(y, 0.0)


if __name__ == "__main__":
    key = jax.random.PRNGKey(0)
    k_x, k_w, k_b, k_g, k_be = jax.random.split(key, 5)

    N, Cin, H, W = 2, 17, 16, 16
    Cout = 32

    x = jax.random.normal(k_x, (N, Cin, H, W), dtype=jnp.float32)
    weight = 0.1 * jax.random.normal(k_w, (Cout, Cin, 3, 3), dtype=jnp.float32)
    bias = 0.1 * jax.random.normal(k_b, (Cout,), dtype=jnp.float32)
    gamma = 1.0 + 0.1 * jax.random.normal(k_g, (Cout,), dtype=jnp.float32)
    beta = 0.1 * jax.random.normal(k_be, (Cout,), dtype=jnp.float32)

    fwd = jax.jit(conv_block_forward)
    out = jax.block_until_ready(fwd(x, weight, bias, gamma, beta))
    ref = jax.block_until_ready(_reference(x, weight, bias, gamma, beta))

    assert out.shape == (N, Cout, H, W)
    # Tolerance 4e-2: bf16 MXU operands (f32 accumulation, K = 9*Cin) plus the
    # bf16 interchange y tensor; BN statistics / scale / shift stay in f32.
    err = float(jnp.max(jnp.abs(out - ref)))
    assert err < 4e-2, f"mismatch vs pure-JAX reference: {err}"

    print("KERNEL_OK")
</pallas_src>

<mosaic_0001>
module attributes {stable_mosaic.version = 11 : i64} {
  func.func @conv_stats_kernel(%arg0: i32, %arg1: i32, %arg2: memref<1x1x64x324xbf16, #tpu.memory_space<vmem>>, %arg3: memref<3x32x64xbf16, #tpu.memory_space<vmem>>, %arg4: memref<32x1xf32, #tpu.memory_space<vmem>>, %arg5: memref<1x288xf32, #tpu.memory_space<vmem>>, %arg6: memref<1x1x32x288xbf16, #tpu.memory_space<vmem>>, %arg7: memref<1x1x32x1xf32, #tpu.memory_space<vmem>>, %arg8: memref<1x1x32x1xf32, #tpu.memory_space<vmem>>) attributes {dimension_semantics = [#tpu.dimension_semantics<parallel>, #tpu.dimension_semantics<parallel>], iteration_bounds = array<i64: 2, 1>, scalar_prefetch = 0 : i64, scratch_operands = 0 : i64, tpu.core_type = #tpu.core_type<tc>, window_params = [{transform_indices = @transform_0, window_bounds = array<i64: 1, 1, 64, 324>}, {pipeline_mode = #tpu.pipeline_mode<synchronous>, transform_indices = @transform_1, window_bounds = array<i64: 3, 32, 64>}, {pipeline_mode = #tpu.pipeline_mode<synchronous>, transform_indices = @transform_2, window_bounds = array<i64: 32, 1>}, {pipeline_mode = #tpu.pipeline_mode<synchronous>, transform_indices = @transform_3, window_bounds = array<i64: 1, 288>}, {transform_indices = @transform_4, window_bounds = array<i64: 1, 1, 32, 288>}, {transform_indices = @transform_5, window_bounds = array<i64: 1, 1, 32, 1>}, {transform_indices = @transform_6, window_bounds = array<i64: 1, 1, 32, 1>}]} {
    %c0 = arith.constant 0 : index
    %c0_0 = arith.constant 0 : index
    %c0_1 = arith.constant 0 : index
    %c0_2 = arith.constant 0 : index
    %0 = vector.load %arg2[%c0, %c0_0, %c0_1, %c0_2] : memref<1x1x64x324xbf16, #tpu.memory_space<vmem>>, vector<1x1x64x324xbf16>
    %1 = vector.shape_cast %0 : vector<1x1x64x324xbf16> to vector<64x324xbf16>
    %cst = arith.constant 0.000000e+00 : f32
    %2 = vector.broadcast %cst : f32 to vector<32x288xf32>
    %3 = vector.extract_strided_slice %1 {offsets = [0, 0], sizes = [64, 288], strides = [1, 1]} : vector<64x324xbf16> to vector<64x288xbf16>
    %c0_3 = arith.constant 0 : index
    %c0_4 = arith.constant 0 : index
    %c0_5 = arith.constant 0 : index
    %4 = vector.load %arg3[%c0_3, %c0_4, %c0_5] : memref<3x32x64xbf16, #tpu.memory_space<vmem>>, vector<1x32x64xbf16>
    %5 = vector.shape_cast %4 : vector<1x32x64xbf16> to vector<32x64xbf16>
    %cst_6 = arith.constant dense<0.000000e+00> : vector<32x288xf32>
    %6 = tpu.matmul %5, %3, %cst_6 {dimension_numbers = #tpu.dot_dimension_numbers<[1], [0], [0], [1], [0, 0, 1, 1], [], []>} : vector<32x64xbf16>, vector<64x288xbf16>, vector<32x288xf32> -> vector<32x288xf32>
    %7 = arith.addf %2, %6 : vector<32x288xf32>
    %8 = vector.extract_strided_slice %1 {offsets = [0, 18], sizes = [64, 288], strides = [1, 1]} : vector<64x324xbf16> to vector<64x288xbf16>
    %c1 = arith.constant 1 : index
    %c0_7 = arith.constant 0 : index
    %c0_8 = arith.constant 0 : index
    %9 = vector.load %arg3[%c1, %c0_7, %c0_8] : memref<3x32x64xbf16, #tpu.memory_space<vmem>>, vector<1x32x64xbf16>
    %10 = vector.shape_cast %9 : vector<1x32x64xbf16> to vector<32x64xbf16>
    %cst_9 = arith.constant dense<0.000000e+00> : vector<32x288xf32>
    %11 = tpu.matmul %10, %8, %cst_9 {dimension_numbers = #tpu.dot_dimension_numbers<[1], [0], [0], [1], [0, 0, 1, 1], [], []>} : vector<32x64xbf16>, vector<64x288xbf16>, vector<32x288xf32> -> vector<32x288xf32>
    %12 = arith.addf %7, %11 : vector<32x288xf32>
    %13 = vector.extract_strided_slice %1 {offsets = [0, 36], sizes = [64, 288], strides = [1, 1]} : vector<64x324xbf16> to vector<64x288xbf16>
    %c2 = arith.constant 2 : index
    %c0_10 = arith.constant 0 : index
    %c0_11 = arith.constant 0 : index
    %14 = vector.load %arg3[%c2, %c0_10, %c0_11] : memref<3x32x64xbf16, #tpu.memory_space<vmem>>, vector<1x32x64xbf16>
    %15 = vector.shape_cast %14 : vector<1x32x64xbf16> to vector<32x64xbf16>
    %cst_12 = arith.constant dense<0.000000e+00> : vector<32x288xf32>
    %16 = tpu.matmul %15, %13, %cst_12 {dimension_numbers = #tpu.dot_dimension_numbers<[1], [0], [0], [1], [0, 0, 1, 1], [], []>} : vector<32x64xbf16>, vector<64x288xbf16>, vector<32x288xf32> -> vector<32x288xf32>
    %17 = arith.addf %12, %16 : vector<32x288xf32>
    %c0_13 = arith.constant 0 : index
    %c0_14 = arith.constant 0 : index
    %18 = vector.load %arg5[%c0_13, %c0_14] : memref<1x288xf32, #tpu.memory_space<vmem>>, vector<1x288xf32>
    %19 = vector.broadcast %18 : vector<1x288xf32> to vector<32x288xf32>
    %20 = arith.mulf %17, %19 : vector<32x288xf32>
    %cst_15 = arith.constant dense<0.000000e+00> : vector<32xf32>
    %21 = vector.multi_reduction <add>, %20, %cst_15 [1] : vector<32x288xf32> to vector<32xf32>
    %22 = vector.shape_cast %21 : vector<32xf32> to vector<32x1xf32>
    %c0_16 = arith.constant 0 : index
    %c0_17 = arith.constant 0 : index
    %c0_18 = arith.constant 0 : index
    %c0_19 = arith.constant 0 : index
    %23 = vector.load %arg7[%c0_16, %c0_17, %c0_18, %c0_19] : memref<1x1x32x1xf32, #tpu.memory_space<vmem>>, vector<1x1x32x1xf32>
    %24 = vector.shape_cast %23 : vector<1x1x32x1xf32> to vector<32x1xf32>
    %25 = vector.shape_cast %22 : vector<32x1xf32> to vector<1x1x32x1xf32>
    tpu.vector_store %arg7[%c0_16, %c0_17, %c0_18, %c0_19], %25 {strides = array<i32>} : memref<1x1x32x1xf32, #tpu.memory_space<vmem>>, vector<1x1x32x1xf32>,
    %26 = arith.mulf %20, %17 : vector<32x288xf32>
    %cst_20 = arith.constant dense<0.000000e+00> : vector<32xf32>
    %27 = vector.multi_reduction <add>, %26, %cst_20 [1] : vector<32x288xf32> to vector<32xf32>
    %28 = vector.shape_cast %27 : vector<32xf32> to vector<32x1xf32>
    %c0_21 = arith.constant 0 : index
    %c0_22 = arith.constant 0 : index
    %c0_23 = arith.constant 0 : index
    %c0_24 = arith.constant 0 : index
    %29 = vector.load %arg8[%c0_21, %c0_22, %c0_23, %c0_24] : memref<1x1x32x1xf32, #tpu.memory_space<vmem>>, vector<1x1x32x1xf32>
    %30 = vector.shape_cast %29 : vector<1x1x32x1xf32> to vector<32x1xf32>
    %31 = vector.shape_cast %28 : vector<32x1xf32> to vector<1x1x32x1xf32>
    tpu.vector_store %arg8[%c0_21, %c0_22, %c0_23, %c0_24], %31 {strides = array<i32>} : memref<1x1x32x1xf32, #tpu.memory_space<vmem>>, vector<1x1x32x1xf32>,
    %c0_25 = arith.constant 0 : index
    %c0_26 = arith.constant 0 : index
    %32 = vector.load %arg4[%c0_25, %c0_26] : memref<32x1xf32, #tpu.memory_space<vmem>>, vector<32x1xf32>
    %33 = vector.broadcast %32 : vector<32x1xf32> to vector<32x288xf32>
    %34 = arith.addf %17, %33 : vector<32x288xf32>
    %35 = arith.truncf %34 : vector<32x288xf32> to vector<32x288xbf16>
    %c0_27 = arith.constant 0 : index
    %c0_28 = arith.constant 0 : index
    %c0_29 = arith.constant 0 : index
    %c0_30 = arith.constant 0 : index
    %36 = vector.load %arg6[%c0_27, %c0_28, %c0_29, %c0_30] : memref<1x1x32x288xbf16, #tpu.memory_space<vmem>>, vector<1x1x32x288xbf16>
    %37 = vector.shape_cast %36 : vector<1x1x32x288xbf16> to vector<32x288xbf16>
    %38 = vector.shape_cast %35 : vector<32x288xbf16> to vector<1x1x32x288xbf16>
    tpu.vector_store %arg6[%c0_27, %c0_28, %c0_29, %c0_30], %38 {strides = array<i32>} : memref<1x1x32x288xbf16, #tpu.memory_space<vmem>>, vector<1x1x32x288xbf16>,
    return
  }
  func.func @transform_0(%arg0: i32, %arg1: i32) -> (i32, i32, i32, i32) {
    %c0_i32 = arith.constant 0 : i32
    %c0_i32_0 = arith.constant 0 : i32
    %c0_i32_1 = arith.constant 0 : i32
    return %arg0, %arg1, %c0_i32, %c0_i32_0 : i32, i32, i32, i32
  }
  func.func @transform_1(%arg0: i32, %arg1: i32) -> (i32, i32, i32) {
    %c0_i32 = arith.constant 0 : i32
    %c0_i32_0 = arith.constant 0 : i32
    %c0_i32_1 = arith.constant 0 : i32
    %c0_i32_2 = arith.constant 0 : i32
    return %c0_i32, %c0_i32_0, %c0_i32_1 : i32, i32, i32
  }
  func.func @transform_2(%arg0: i32, %arg1: i32) -> (i32, i32) {
    %c0_i32 = arith.constant 0 : i32
    %c0_i32_0 = arith.constant 0 : i32
    %c0_i32_1 = arith.constant 0 : i32
    return %c0_i32, %c0_i32_0 : i32, i32
  }
  func.func @transform_3(%arg0: i32, %arg1: i32) -> (i32, i32) {
    %c0_i32 = arith.constant 0 : i32
    %c0_i32_0 = arith.constant 0 : i32
    %c0_i32_1 = arith.constant 0 : i32
    return %c0_i32, %c0_i32_0 : i32, i32
  }
  func.func @transform_4(%arg0: i32, %arg1: i32) -> (i32, i32, i32, i32) {
    %c0_i32 = arith.constant 0 : i32
    %c0_i32_0 = arith.constant 0 : i32
    %c0_i32_1 = arith.constant 0 : i32
    return %arg0, %arg1, %c0_i32, %c0_i32_0 : i32, i32, i32, i32
  }
  func.func @transform_5(%arg0: i32, %arg1: i32) -> (i32, i32, i32, i32) {
    %c0_i32 = arith.constant 0 : i32
    %c0_i32_0 = arith.constant 0 : i32
    %c0_i32_1 = arith.constant 0 : i32
    return %arg0, %arg1, %c0_i32, %c0_i32_0 : i32, i32, i32, i32
  }
  func.func @transform_6(%arg0: i32, %arg1: i32) -> (i32, i32, i32, i32) {
    %c0_i32 = arith.constant 0 : i32
    %c0_i32_0 = arith.constant 0 : i32
    %c0_i32_1 = arith.constant 0 : i32
    return %arg0, %arg1, %c0_i32, %c0_i32_0 : i32, i32, i32, i32
  }
}

module attributes {stable_mosaic.version = 11 : i64} {
  func.func @bn_relu_kernel(%arg0: i32, %arg1: i32, %arg2: memref<1x1x32x288xbf16, #tpu.memory_space<vmem>>, %arg3: memref<32x1xf32, #tpu.memory_space<vmem>>, %arg4: memref<32x1xf32, #tpu.memory_space<vmem>>, %arg5: memref<1x1x32x288xf32, #tpu.memory_space<vmem>>) attributes {dimension_semantics = [#tpu.dimension_semantics<parallel>, #tpu.dimension_semantics<parallel>], iteration_bounds = array<i64: 2, 1>, scalar_prefetch = 0 : i64, scratch_operands = 0 : i64, tpu.core_type = #tpu.core_type<tc>, window_params = [{transform_indices = @transform_0, window_bounds = array<i64: 1, 1, 32, 288>}, {pipeline_mode = #tpu.pipeline_mode<synchronous>, transform_indices = @transform_1, window_bounds = array<i64: 32, 1>}, {pipeline_mode = #tpu.pipeline_mode<synchronous>, transform_indices = @transform_2, window_bounds = array<i64: 32, 1>}, {transform_indices = @transform_3, window_bounds = array<i64: 1, 1, 32, 288>}]} {
    %c0 = arith.constant 0 : index
    %c0_0 = arith.constant 0 : index
    %c0_1 = arith.constant 0 : index
    %c0_2 = arith.constant 0 : index
    %0 = vector.load %arg2[%c0, %c0_0, %c0_1, %c0_2] : memref<1x1x32x288xbf16, #tpu.memory_space<vmem>>, vector<1x1x32x288xbf16>
    %1 = vector.shape_cast %0 : vector<1x1x32x288xbf16> to vector<32x288xbf16>
    %2 = arith.extf %1 : vector<32x288xbf16> to vector<32x288xf32>
    %c0_3 = arith.constant 0 : index
    %c0_4 = arith.constant 0 : index
    %3 = vector.load %arg3[%c0_3, %c0_4] : memref<32x1xf32, #tpu.memory_space<vmem>>, vector<32x1xf32>
    %4 = vector.broadcast %3 : vector<32x1xf32> to vector<32x288xf32>
    %5 = arith.mulf %2, %4 : vector<32x288xf32>
    %c0_5 = arith.constant 0 : index
    %c0_6 = arith.constant 0 : index
    %6 = vector.load %arg4[%c0_5, %c0_6] : memref<32x1xf32, #tpu.memory_space<vmem>>, vector<32x1xf32>
    %7 = vector.broadcast %6 : vector<32x1xf32> to vector<32x288xf32>
    %8 = arith.addf %5, %7 : vector<32x288xf32>
    %cst = arith.constant 0.000000e+00 : f32
    %9 = vector.broadcast %cst : f32 to vector<32x288xf32>
    %10 = arith.maximumf %8, %9 : vector<32x288xf32>
    %c0_7 = arith.constant 0 : index
    %c0_8 = arith.constant 0 : index
    %c0_9 = arith.constant 0 : index
    %c0_10 = arith.constant 0 : index
    %11 = vector.load %arg5[%c0_7, %c0_8, %c0_9, %c0_10] : memref<1x1x32x288xf32, #tpu.memory_space<vmem>>, vector<1x1x32x288xf32>
    %12 = vector.shape_cast %11 : vector<1x1x32x288xf32> to vector<32x288xf32>
    %13 = vector.shape_cast %10 : vector<32x288xf32> to vector<1x1x32x288xf32>
    tpu.vector_store %arg5[%c0_7, %c0_8, %c0_9, %c0_10], %13 {strides = array<i32>} : memref<1x1x32x288xf32, #tpu.memory_space<vmem>>, vector<1x1x32x288xf32>,
    return
  }
  func.func @transform_0(%arg0: i32, %arg1: i32) -> (i32, i32, i32, i32) {
    %c0_i32 = arith.constant 0 : i32
    %c0_i32_0 = arith.constant 0 : i32
    %c0_i32_1 = arith.constant 0 : i32
    return %arg0, %arg1, %c0_i32, %c0_i32_0 : i32, i32, i32, i32
  }
  func.func @transform_1(%arg0: i32, %arg1: i32) -> (i32, i32) {
    %c0_i32 = arith.constant 0 : i32
    %c0_i32_0 = arith.constant 0 : i32
    %c0_i32_1 = arith.constant 0 : i32
    return %c0_i32, %c0_i32_0 : i32, i32
  }
  func.func @transform_2(%arg0: i32, %arg1: i32) -> (i32, i32) {
    %c0_i32 = arith.constant 0 : i32
    %c0_i32_0 = arith.constant 0 : i32
    %c0_i32_1 = arith.constant 0 : i32
    return %c0_i32, %c0_i32_0 : i32, i32
  }
  func.func @transform_3(%arg0: i32, %arg1: i32) -> (i32, i32, i32, i32) {
    %c0_i32 = arith.constant 0 : i32
    %c0_i32_0 = arith.constant 0 : i32
    %c0_i32_1 = arith.constant 0 : i32
    return %arg0, %arg1, %c0_i32, %c0_i32_0 : i32, i32, i32, i32
  }
}

</mosaic_0001>

<llo_original>
// kernel: conv_block_forward.3
$region0: #{conv_block_forward.3}
  #allocation0 [shape = 'u32[]', space=smem, size = 0x4, offset = 0x4, fixed_abs, tag = 'smem constant byte address 0x4 - core index']
  #allocation1 [shape = 'u32[144,128]{1,0:T(1,128)}', space=vmem, size = 0x12000, scoped, tag = 'internal scratch']
  %s0 = inlined_call_operand.vmem [shape: bf16[2,1,32,288], index: 0, kind: input, shape index: {}]
  %s1 = inlined_call_operand.vmem [shape: f32[32,1], index: 1, kind: input, shape index: {}]
  %s2 = inlined_call_operand.vmem [shape: f32[32,1], index: 2, kind: input, shape index: {}]
  %s3 = inlined_call_operand.vmem [shape: f32[2,1,32,288], index: 3, kind: output, shape index: {}]
  %s4 = sld [smem:[#allocation0]]
  $region45: #{conv_block_forward.3} parent=0
    _
  %s6 = ssub.s32 1, %s4
  %s7 = scalar_select 0, %s6, %s4
  loop: start=0, step=1, limit=4
  $region2: #{conv_block_forward.3} parent=0 // loop_pre_header
    _
  $region3: #{conv_block_forward.3} parent=0 // loop_header
    %s9 = sphi 0, %s13
    %p10 = scmp.ge.s32.totalorder %s9, 4
    %s16 = sphi 0, %s28
    %s17 = sphi 0, %s24
    %s18 = sphi 0, %s16
    %s19 = sphi 0, %s17
    %s20 = sphi 0, %s18
    %s21 = sphi 0, %s19
    %s33 = sphi 0, %s35
    %s36 = sphi 0, %s33
    %s37 = sphi 0, %s36
    %s53 = sphi 0, %s37
    %s57 = sphi 0, %s57
    %s59 = sphi 0, %s57
    %s60 = sphi 0, %s59
    %s74 = sphi 0, %s60
    %s78 = sphi 0, %s78
    %s80 = sphi 0, %s78
    %s81 = sphi 0, %s80
    %s95 = sphi 0, %s81
    %s103 = sphi 0, %s105
    %s106 = sphi 0, %s103
    %s107 = sphi 0, %s106
    %s123 = sphi 0, %s107
  $region4: #{conv_block_forward.3} parent=0 // loop_header_branch
    %12 = sbr.rel (%p10) target = $region8
  $region5: #{conv_block_forward.3} parent=0 // loop_body
    %s14 = ssub.s32 %s9, 1
    %s15 = ssub.s32 %s9, 2
    %s22 = sadd.s32 1, %s17
    %p23 = scmp.ge.s32.totalorder %s22, 1
    %s24 = scalar_select %p23, 0, %s22
    %s25 = sadd.s32 1, %s16
    %s26 = scalar_select %p23, %s25, %s16
    %p27 = scmp.ge.s32.totalorder %s26, 2
    %s28 = scalar_select %p27, 0, %s26
    %s29 = ssub.s32 %s16, %s28
    %s30 = ssub.s32 %s17, %s24
    %s31 = sor.u32 %s29, %s30
    %p32 = scmp.eq.s32.totalorder %s31, 0
    %s34 = sadd.s32 %s33, 1
    %s35 = scalar_select %p32, %s33, %s34
    %p38 = pneg %p32
    %p39 = scmp.eq.s32.totalorder %s9, 1
    %p40 = por %p38, %p39
    %p41 = scmp.ne.s32.totalorder %s33, %s36
    %p42 = scmp.eq.s32.totalorder %s9, 0
    %p43 = por %p41, %p42
    %p44 = scmp.ne.s32.totalorder %s33, %s36
    %p45 = scmp.eq.s32.totalorder %s14, 1
    %p46 = por %p44, %p45
    %p47 = scmp.ne.s32.totalorder %s36, %s37
    %p48 = scmp.eq.s32.totalorder %s14, 0
    %p49 = por %p47, %p48
    %p50 = scmp.ne.s32.totalorder %s36, %s37
    %p51 = scmp.eq.s32.totalorder %s15, 1
    %p52 = por %p50, %p51
    %p54 = scmp.ne.s32.totalorder %s37, %s53
    %p55 = scmp.eq.s32.totalorder %s15, 0
    %p56 = por %p54, %p55
    %s58 = sadd.s32 %s57, 1
    %p61 = scmp.eq.s32.totalorder %s9, 1
    %p62 = scmp.ne.s32.totalorder %s57, %s59
    %p63 = scmp.eq.s32.totalorder %s9, 0
    %p64 = por %p62, %p63
    %p65 = scmp.ne.s32.totalorder %s57, %s59
    %p66 = scmp.eq.s32.totalorder %s14, 1
    %p67 = por %p65, %p66
    %p68 = scmp.ne.s32.totalorder %s59, %s60
    %p69 = scmp.eq.s32.totalorder %s14, 0
    %p70 = por %p68, %p69
    %p71 = scmp.ne.s32.totalorder %s59, %s60
    %p72 = scmp.eq.s32.totalorder %s15, 1
    %p73 = por %p71, %p72
    %p75 = scmp.ne.s32.totalorder %s60, %s74
    %p76 = scmp.eq.s32.totalorder %s15, 0
    %p77 = por %p75, %p76
    %s79 = sadd.s32 %s78, 1
    %p82 = scmp.eq.s32.totalorder %s9, 1
    %p83 = scmp.ne.s32.totalorder %s78, %s80
    %p84 = scmp.eq.s32.totalorder %s9, 0
    %p85 = por %p83, %p84
    %p86 = scmp.ne.s32.totalorder %s78, %s80
    %p87 = scmp.eq.s32.totalorder %s14, 1
    %p88 = por %p86, %p87
    %p89 = scmp.ne.s32.totalorder %s80, %s81
    %p90 = scmp.eq.s32.totalorder %s14, 0
    %p91 = por %p89, %p90
    %p92 = scmp.ne.s32.totalorder %s80, %s81
    %p93 = scmp.eq.s32.totalorder %s15, 1
    %p94 = por %p92, %p93
    %p96 = scmp.ne.s32.totalorder %s81, %s95
    %p97 = scmp.eq.s32.totalorder %s15, 0
    %p98 = por %p96, %p97
    %s99 = ssub.s32 %s16, %s28
    %s100 = ssub.s32 %s17, %s24
    %s101 = sor.u32 %s99, %s100
    %p102 = scmp.eq.s32.totalorder %s101, 0
    %s104 = sadd.s32 %s103, 1
    %s105 = scalar_select %p102, %s103, %s104
    %p108 = pneg %p102
    %p109 = scmp.eq.s32.totalorder %s9, 1
    %p110 = por %p108, %p109
    %p111 = scmp.ne.s32.totalorder %s103, %s106
    %p112 = scmp.eq.s32.totalorder %s9, 0
    %p113 = por %p111, %p112
    %p114 = scmp.ne.s32.totalorder %s103, %s106
    %p115 = scmp.eq.s32.totalorder %s14, 1
    %p116 = por %p114, %p115
    %p117 = scmp.ne.s32.totalorder %s106, %s107
    %p118 = scmp.eq.s32.totalorder %s14, 0
    %p119 = por %p117, %p118
    %p120 = scmp.ne.s32.totalorder %s106, %s107
    %p121 = scmp.eq.s32.totalorder %s15, 1
    %p122 = por %p120, %p121
    %p124 = scmp.ne.s32.totalorder %s107, %s123
    %p125 = scmp.eq.s32.totalorder %s15, 0
    %p126 = por %p124, %p125
    %p127 = scmp.le.s32.totalorder 1, %s9
    %p128 = scmp.lt.s32.totalorder %s9, 3
    %p129 = pnand %p127, %p128
    %p130 = pneg %p129
    // Predicated region
    $region9: #{conv_block_forward.3} parent=5 // pred_check
      _
    $region10: #{conv_block_forward.3} parent=5 // pred_check_branch
      %132 = sbr.rel (%p129) target = $region12
    $region11: #{conv_block_forward.3} parent=5 // pred_region
      %s133 = ssub.s32 %s9, 1
      // Predicated region
      $region13: #{conv_block_forward.3} parent=11 // pred_check
        %p134 = pneg %p70
      $region14: #{conv_block_forward.3} parent=11 // pred_check_branch
        %136 = sbr.rel (%p134) target = $region16
      $region15: #{conv_block_forward.3} parent=11 // pred_region
        _
      $region16: #{conv_block_forward.3} parent=11 // pred_fallthru
        _
      // Predicated region
      $region17: #{conv_block_forward.3} parent=11 // pred_check
        %p137 = pneg %p91
      $region18: #{conv_block_forward.3} parent=11 // pred_check_branch
        %139 = sbr.rel (%p137) target = $region20
      $region19: #{conv_block_forward.3} parent=11 // pred_region
        _
      $region20: #{conv_block_forward.3} parent=11 // pred_fallthru
        _
    $region12: #{conv_block_forward.3} parent=5 // pred_fallthru
      _
    %p140 = scmp.lt.s32.totalorder %s9, 2
    // Predicated region
    $region21: #{conv_block_forward.3} parent=5 // pred_check
      %p141 = pneg %p140
    $region22: #{conv_block_forward.3} parent=5 // pred_check_branch
      %143 = sbr.rel (%p141) target = $region24
    $region23: #{conv_block_forward.3} parent=5 // pred_region
      // Predicated region
      $region25: #{conv_block_forward.3} parent=23 // pred_check
        %p144 = pneg %p43
      $region26: #{conv_block_forward.3} parent=23 // pred_check_branch
        %146 = sbr.rel (%p144) target = $region28
      $region27: #{conv_block_forward.3} parent=23 // pred_region
        %p147 = scmp.lt.s32.totalorder %s16, 1
        %s148 = scalar_select %p147, %s16, 1
        %p149 = scmp.lt.s32.totalorder %s17, 0
        %s150 = scalar_select %p149, %s17, 0
        %s151 = smul.addr %s150, 12
        %s152 = smul.addr %s148, 12
        %s153 = sadd.s32 %s151, %s152
        %s154 = smul.addr %s153, 4
        %s155 = scalar_lea.vmem %s0, %s154
      $region28: #{conv_block_forward.3} parent=23 // pred_fallthru
        _
    $region24: #{conv_block_forward.3} parent=5 // pred_fallthru
      _
    %p156 = scmp.le.s32.totalorder 1, %s9
    %p157 = scmp.lt.s32.totalorder %s9, 3
    %p158 = pnand %p156, %p157
    %p159 = pneg %p158
    // Predicated region
    $region29: #{conv_block_forward.3} parent=5 // pred_check
      _
    $region30: #{conv_block_forward.3} parent=5 // pred_check_branch
      %161 = sbr.rel (%p158) target = $region32
    $region31: #{conv_block_forward.3} parent=5 // pred_region
      %s162 = ssub.s32 %s9, 1
      %p163 = scmp.lt.s32.totalorder %s18, 1
      %s164 = scalar_select %p163, %s18, 1
      %p165 = scmp.lt.s32.totalorder %s19, 0
      %s166 = scalar_select %p165, %s19, 0
      %s167 = smul.addr %s166, 12
      %s168 = smul.addr %s164, 12
      %s169 = sadd.s32 %s167, %s168
      %s170 = smul.addr %s169, 4
      %s171 = scalar_lea.vmem %s0, %s170
      %p172 = pneg %p49
      %p173 = pneg %p46
      %p174 = pneg %p70
      %p175 = pneg %p67
      %p176 = pneg %p91
      %p177 = pneg %p88
      %p178 = pneg %p119
      %p179 = pneg %p116
      %p180 = scmp.lt.s32.totalorder %s18, 1
      %s181 = scalar_select %p180, %s18, 1
      %p182 = scmp.lt.s32.totalorder %s19, 0
      %s183 = scalar_select %p182, %s19, 0
      %s184 = smul.addr %s183, 12
      %s185 = smul.addr %s181, 12
      %s186 = sadd.s32 %s184, %s185
      %s187 = smul.addr %s186, 8
      %s188 = scalar_lea.vmem %s3, %s187
      %p189 = scmp.lt.s32.totalorder %s18, 1
      %s190 = scalar_select %p189, %s18, 1
      %p191 = scmp.lt.s32.totalorder %s19, 0
      %s192 = scalar_select %p191, %s19, 0
      %s193 = smul.addr %s192, 12
      %s194 = smul.addr %s190, 12
      %s195 = sadd.s32 %s193, %s194
      %s196 = smul.addr %s195, 4
      %s197 = scalar_lea.vmem %s0, %s196
      %p198 = scmp.lt.s32.totalorder %s18, 1
      %s199 = scalar_select %p198, %s18, 1
      %p200 = scmp.lt.s32.totalorder %s19, 0
      %s201 = scalar_select %p200, %s19, 0
      %s202 = smul.addr %s201, 12
      %s203 = smul.addr %s199, 12
      %s204 = sadd.s32 %s202, %s203
      %s205 = smul.addr %s204, 8
      %s206 = scalar_lea.vmem %s3, %s205
      %v207 = vld [vmem:[%s197] sm:$0xff]
      %v208 = vld [vmem:[%s197 + $0x8] sm:$0xf]
      %v209 = vld [vmem:[%s197 + $0xc] sm:$0xff]
      %v210 = vld [vmem:[%s197 + $0x14] sm:$0xf]
      %v211 = vld [vmem:[%s197 + $0x18] sm:$0xff]
      %v212 = vld [vmem:[%s197 + $0x20] sm:$0xf]
      %v213 = vld [vmem:[%s197 + $0x24] sm:$0xff]
      %v214 = vld [vmem:[%s197 + $0x2c] sm:$0xf]
      %v215 = vunpack.c.l.bf16 %v207
      %v216 = vunpack.c.h.bf16 %v207
      %v217 = vunpack.c.l.bf16 %v208
      %v218 = vunpack.c.l.bf16 %v209
      %v219 = vunpack.c.h.bf16 %v209
      %v220 = vunpack.c.l.bf16 %v210
      %v221 = vunpack.c.l.bf16 %v211
      %v222 = vunpack.c.h.bf16 %v211
      %v223 = vunpack.c.l.bf16 %v212
      %v224 = vunpack.c.l.bf16 %v213
      %v225 = vunpack.c.h.bf16 %v213
      %v226 = vunpack.c.l.bf16 %v214
      %v227 = vld [vmem:[%s1] sm:$0xff]
      %v228 = vld [vmem:[%s1 + $0x8] sm:$0xff]
      %v229 = vld [vmem:[%s1 + $0x10] sm:$0xff]
      %v230 = vld [vmem:[%s1 + $0x18] sm:$0xff]
      %232 = vset.pattern.permute.xlu0 0
      %233 = vperm.xlu0 %232, %v227
      %v234 = vpop.permute.xlu0 %233
      %237 = vset.pattern.permute.xlu0 0
      %238 = vperm.xlu0 %237, %v228
      %v239 = vpop.permute.xlu0 %238
      %242 = vset.pattern.permute.xlu0 0
      %243 = vperm.xlu0 %242, %v229
      %v244 = vpop.permute.xlu0 %243
      %247 = vset.pattern.permute.xlu0 0
      %248 = vperm.xlu0 %247, %v230
      %v249 = vpop.permute.xlu0 %248
      %v251 = vmul.f32 %v215, %v234
      %v252 = vmul.f32 %v216, %v234
      %v253 = vmul.f32 %v217, %v234
      %v254 = vmul.f32 %v218, %v239
      %v255 = vmul.f32 %v219, %v239
      %v256 = vmul.f32 %v220, %v239
      %v257 = vmul.f32 %v221, %v244
      %v258 = vmul.f32 %v222, %v244
      %v259 = vmul.f32 %v223, %v244
      %v260 = vmul.f32 %v224, %v249
      %v261 = vmul.f32 %v225, %v249
      %v262 = vmul.f32 %v226, %v249
      %v263 = vld [vmem:[%s2] sm:$0xff]
      %v264 = vld [vmem:[%s2 + $0x8] sm:$0xff]
      %v265 = vld [vmem:[%s2 + $0x10] sm:$0xff]
      %v266 = vld [vmem:[%s2 + $0x18] sm:$0xff]
      %268 = vset.pattern.permute.xlu0 0
      %269 = vperm.xlu0 %268, %v263
      %v270 = vpop.permute.xlu0 %269
      %273 = vset.pattern.permute.xlu0 0
      %274 = vperm.xlu0 %273, %v264
      %v275 = vpop.permute.xlu0 %274
      %278 = vset.pattern.permute.xlu0 0
      %279 = vperm.xlu0 %278, %v265
      %v280 = vpop.permute.xlu0 %279
      %283 = vset.pattern.permute.xlu0 0
      %284 = vperm.xlu0 %283, %v266
      %v285 = vpop.permute.xlu0 %284
      %v287 = vadd.f32 %v251, %v270
      %v288 = vadd.f32 %v252, %v270
      %v289 = vadd.f32 %v253, %v270
      %v290 = vadd.f32 %v254, %v275
      %v291 = vadd.f32 %v255, %v275
      %v292 = vadd.f32 %v256, %v275
      %v293 = vadd.f32 %v257, %v280
      %v294 = vadd.f32 %v258, %v280
      %v295 = vadd.f32 %v259, %v280
      %v296 = vadd.f32 %v260, %v285
      %v297 = vadd.f32 %v261, %v285
      %v298 = vadd.f32 %v262, %v285
      %v299 = vmax.f32 %v287, 0.0
      %v300 = vmax.f32 %v288, 0.0
      %v301 = vmax.f32 %v289, 0.0
      %v302 = vmax.f32 %v290, 0.0
      %v303 = vmax.f32 %v291, 0.0
      %v304 = vmax.f32 %v292, 0.0
      %v305 = vmax.f32 %v293, 0.0
      %v306 = vmax.f32 %v294, 0.0
      %v307 = vmax.f32 %v295, 0.0
      %v308 = vmax.f32 %v296, 0.0
      %v309 = vmax.f32 %v297, 0.0
      %v310 = vmax.f32 %v298, 0.0
      %311 = vst [vmem:[%s206] sm:$0xff] %v299
      %312 = vst [vmem:[%s206 + $0x8] sm:$0xff] %v300
      %vm313 = vcmask 261120
      %314 = vst.msk [vmem:[%s206 + $0x10] sm:$0xff] %vm313, %v301
      %315 = vst [vmem:[%s206 + $0x18] sm:$0xff] %v302
      %316 = vst [vmem:[%s206 + $0x20] sm:$0xff] %v303
      %317 = vst.msk [vmem:[%s206 + $0x28] sm:$0xff] %vm313, %v304
      %318 = vst [vmem:[%s206 + $0x30] sm:$0xff] %v305
      %319 = vst [vmem:[%s206 + $0x38] sm:$0xff] %v306
      %320 = vst.msk [vmem:[%s206 + $0x40] sm:$0xff] %vm313, %v307
      %321 = vst [vmem:[%s206 + $0x48] sm:$0xff] %v308
      %322 = vst [vmem:[%s206 + $0x50] sm:$0xff] %v309
      %323 = vst.msk [vmem:[%s206 + $0x58] sm:$0xff] %vm313, %v310
      %p324 = scmp.lt.s32.totalorder %s18, 1
      %s325 = scalar_select %p324, %s18, 1
      %p326 = scmp.lt.s32.totalorder %s19, 0
      %s327 = scalar_select %p326, %s19, 0
      %s328 = smul.addr %s327, 12
      %s329 = smul.addr %s325, 12
      %s330 = sadd.s32 %s328, %s329
      %s331 = smul.addr %s330, 8
      %s332 = scalar_lea.vmem %s3, %s331
      // Predicated region
      $region33: #{conv_block_forward.3} parent=31 // pred_check
        %p333 = pneg %p116
      $region34: #{conv_block_forward.3} parent=31 // pred_check_branch
        %335 = sbr.rel (%p333) target = $region36
      $region35: #{conv_block_forward.3} parent=31 // pred_region
        _
      $region36: #{conv_block_forward.3} parent=31 // pred_fallthru
        _
    $region32: #{conv_block_forward.3} parent=5 // pred_fallthru
      _
    %p336 = scmp.le.s32.totalorder 2, %s9
    // Predicated region
    $region37: #{conv_block_forward.3} parent=5 // pred_check
      %p337 = pneg %p336
    $region38: #{conv_block_forward.3} parent=5 // pred_check_branch
      %339 = sbr.rel (%p337) target = $region40
    $region39: #{conv_block_forward.3} parent=5 // pred_region
      %s340 = ssub.s32 %s9, 2
      // Predicated region
      $region41: #{conv_block_forward.3} parent=39 // pred_check
        %p341 = pneg %p122
      $region42: #{conv_block_forward.3} parent=39 // pred_check_branch
        %343 = sbr.rel (%p341) target = $region44
      $region43: #{conv_block_forward.3} parent=39 // pred_region
        %p344 = scmp.lt.s32.totalorder %s20, 1
        %s345 = scalar_select %p344, %s20, 1
        %p346 = scmp.lt.s32.totalorder %s21, 0
        %s347 = scalar_select %p346, %s21, 0
        %s348 = smul.addr %s347, 12
        %s349 = smul.addr %s345, 12
        %s350 = sadd.s32 %s348, %s349
        %s351 = smul.addr %s350, 8
        %s352 = scalar_lea.vmem %s3, %s351
      $region44: #{conv_block_forward.3} parent=39 // pred_fallthru
        _
    $region40: #{conv_block_forward.3} parent=5 // pred_fallthru
      _
  $region6: #{conv_block_forward.3} parent=0 // loop_footer
    %s13 = sadd.s32 1, %s9
  $region7: #{conv_block_forward.3} parent=0 // loop_footer_branch
    %8 = sbr.rel target = $region3
  $region8: #{conv_block_forward.3} parent=0 // loop_exit
    _

// kernel: conv_block_forward.2
$region0: #{conv_block_forward.2}
  #allocation0 [shape = 'u32[]', space=smem, size = 0x4, offset = 0x4, fixed_abs, tag = 'smem constant byte address 0x4 - core index']
  #allocation1 [shape = 'u32[144,128]{1,0:T(1,128)}', space=vmem, size = 0x12000, scoped, tag = 'internal scratch']
  %s0 = inlined_call_operand.vmem [shape: bf16[2,1,64,324], index: 0, kind: input, shape index: {}]
  %s1 = inlined_call_operand.vmem [shape: bf16[3,32,64], index: 1, kind: input, shape index: {}]
  %s2 = inlined_call_operand.vmem [shape: f32[32,1], index: 2, kind: input, shape index: {}]
  %s3 = inlined_call_operand.vmem [shape: f32[1,288], index: 3, kind: input, shape index: {}]
  %s4 = inlined_call_operand.vmem [shape: bf16[2,1,32,288], index: 4, kind: output, shape index: {0}]
  %s5 = inlined_call_operand.vmem [shape: f32[2,1,32,1], index: 5, kind: output, shape index: {1}]
  %s6 = inlined_call_operand.vmem [shape: f32[2,1,32,1], index: 6, kind: output, shape index: {2}]
  %7 = xla_tuple %s4, %s5, %s6
  %s8 = sld [smem:[#allocation0]]
  $region65: #{conv_block_forward.2} parent=0
    _
  %s10 = ssub.s32 1, %s8
  %s11 = scalar_select 0, %s10, %s8
  loop: start=0, step=1, limit=4
  $region2: #{conv_block_forward.2} parent=0 // loop_pre_header
    _
  $region3: #{conv_block_forward.2} parent=0 // loop_header
    %s13 = sphi 0, %s17
    %p14 = scmp.ge.s32.totalorder %s13, 4
    %s20 = sphi 0, %s32
    %s21 = sphi 0, %s28
    %s22 = sphi 0, %s20
    %s23 = sphi 0, %s21
    %s24 = sphi 0, %s22
    %s25 = sphi 0, %s23
    %s37 = sphi 0, %s39
    %s40 = sphi 0, %s37
    %s41 = sphi 0, %s40
    %s57 = sphi 0, %s41
    %s61 = sphi 0, %s61
    %s63 = sphi 0, %s61
    %s64 = sphi 0, %s63
    %s78 = sphi 0, %s64
    %s82 = sphi 0, %s82
    %s84 = sphi 0, %s82
    %s85 = sphi 0, %s84
    %s99 = sphi 0, %s85
    %s103 = sphi 0, %s103
    %s105 = sphi 0, %s103
    %s106 = sphi 0, %s105
    %s120 = sphi 0, %s106
    %s128 = sphi 0, %s130
    %s131 = sphi 0, %s128
    %s132 = sphi 0, %s131
    %s148 = sphi 0, %s132
    %s156 = sphi 0, %s158
    %s159 = sphi 0, %s156
    %s160 = sphi 0, %s159
    %s176 = sphi 0, %s160
    %s184 = sphi 0, %s186
    %s187 = sphi 0, %s184
    %s188 = sphi 0, %s187
    %s204 = sphi 0, %s188
  $region4: #{conv_block_forward.2} parent=0 // loop_header_branch
    %16 = sbr.rel (%p14) target = $region8
  $region5: #{conv_block_forward.2} parent=0 // loop_body
    %s18 = ssub.s32 %s13, 1
    %s19 = ssub.s32 %s13, 2
    %s26 = sadd.s32 1, %s21
    %p27 = scmp.ge.s32.totalorder %s26, 1
    %s28 = scalar_select %p27, 0, %s26
    %s29 = sadd.s32 1, %s20
    %s30 = scalar_select %p27, %s29, %s20
    %p31 = scmp.ge.s32.totalorder %s30, 2
    %s32 = scalar_select %p31, 0, %s30
    %s33 = ssub.s32 %s20, %s32
    %s34 = ssub.s32 %s21, %s28
    %s35 = sor.u32 %s33, %s34
    %p36 = scmp.eq.s32.totalorder %s35, 0
    %s38 = sadd.s32 %s37, 1
    %s39 = scalar_select %p36, %s37, %s38
    %p42 = pneg %p36
    %p43 = scmp.eq.s32.totalorder %s13, 1
    %p44 = por %p42, %p43
    %p45 = scmp.ne.s32.totalorder %s37, %s40
    %p46 = scmp.eq.s32.totalorder %s13, 0
    %p47 = por %p45, %p46
    %p48 = scmp.ne.s32.totalorder %s37, %s40
    %p49 = scmp.eq.s32.totalorder %s18, 1
    %p50 = por %p48, %p49
    %p51 = scmp.ne.s32.totalorder %s40, %s41
    %p52 = scmp.eq.s32.totalorder %s18, 0
    %p53 = por %p51, %p52
    %p54 = scmp.ne.s32.totalorder %s40, %s41
    %p55 = scmp.eq.s32.totalorder %s19, 1
    %p56 = por %p54, %p55
    %p58 = scmp.ne.s32.totalorder %s41, %s57
    %p59 = scmp.eq.s32.totalorder %s19, 0
    %p60 = por %p58, %p59
    %s62 = sadd.s32 %s61, 1
    %p65 = scmp.eq.s32.totalorder %s13, 1
    %p66 = scmp.ne.s32.totalorder %s61, %s63
    %p67 = scmp.eq.s32.totalorder %s13, 0
    %p68 = por %p66, %p67
    %p69 = scmp.ne.s32.totalorder %s61, %s63
    %p70 = scmp.eq.s32.totalorder %s18, 1
    %p71 = por %p69, %p70
    %p72 = scmp.ne.s32.totalorder %s63, %s64
    %p73 = scmp.eq.s32.totalorder %s18, 0
    %p74 = por %p72, %p73
    %p75 = scmp.ne.s32.totalorder %s63, %s64
    %p76 = scmp.eq.s32.totalorder %s19, 1
    %p77 = por %p75, %p76
    %p79 = scmp.ne.s32.totalorder %s64, %s78
    %p80 = scmp.eq.s32.totalorder %s19, 0
    %p81 = por %p79, %p80
    %s83 = sadd.s32 %s82, 1
    %p86 = scmp.eq.s32.totalorder %s13, 1
    %p87 = scmp.ne.s32.totalorder %s82, %s84
    %p88 = scmp.eq.s32.totalorder %s13, 0
    %p89 = por %p87, %p88
    %p90 = scmp.ne.s32.totalorder %s82, %s84
    %p91 = scmp.eq.s32.totalorder %s18, 1
    %p92 = por %p90, %p91
    %p93 = scmp.ne.s32.totalorder %s84, %s85
    %p94 = scmp.eq.s32.totalorder %s18, 0
    %p95 = por %p93, %p94
    %p96 = scmp.ne.s32.totalorder %s84, %s85
    %p97 = scmp.eq.s32.totalorder %s19, 1
    %p98 = por %p96, %p97
    %p100 = scmp.ne.s32.totalorder %s85, %s99
    %p101 = scmp.eq.s32.totalorder %s19, 0
    %p102 = por %p100, %p101
    %s104 = sadd.s32 %s103, 1
    %p107 = scmp.eq.s32.totalorder %s13, 1
    %p108 = scmp.ne.s32.totalorder %s103, %s105
    %p109 = scmp.eq.s32.totalorder %s13, 0
    %p110 = por %p108, %p109
    %p111 = scmp.ne.s32.totalorder %s103, %s105
    %p112 = scmp.eq.s32.totalorder %s18, 1
    %p113 = por %p111, %p112
    %p114 = scmp.ne.s32.totalorder %s105, %s106
    %p115 = scmp.eq.s32.totalorder %s18, 0
    %p116 = por %p114, %p115
    %p117 = scmp.ne.s32.totalorder %s105, %s106
    %p118 = scmp.eq.s32.totalorder %s19, 1
    %p119 = por %p117, %p118
    %p121 = scmp.ne.s32.totalorder %s106, %s120
    %p122 = scmp.eq.s32.totalorder %s19, 0
    %p123 = por %p121, %p122
    %s124 = ssub.s32 %s20, %s32
    %s125 = ssub.s32 %s21, %s28
    %s126 = sor.u32 %s124, %s125
    %p127 = scmp.eq.s32.totalorder %s126, 0
    %s129 = sadd.s32 %s128, 1
    %s130 = scalar_select %p127, %s128, %s129
    %p133 = pneg %p127
    %p134 = scmp.eq.s32.totalorder %s13, 1
    %p135 = por %p133, %p134
    %p136 = scmp.ne.s32.totalorder %s128, %s131
    %p137 = scmp.eq.s32.totalorder %s13, 0
    %p138 = por %p136, %p137
    %p139 = scmp.ne.s32.totalorder %s128, %s131
    %p140 = scmp.eq.s32.totalorder %s18, 1
    %p141 = por %p139, %p140
    %p142 = scmp.ne.s32.totalorder %s131, %s132
    %p143 = scmp.eq.s32.totalorder %s18, 0
    %p144 = por %p142, %p143
    %p145 = scmp.ne.s32.totalorder %s131, %s132
    %p146 = scmp.eq.s32.totalorder %s19, 1
    %p147 = por %p145, %p146
    %p149 = scmp.ne.s32.totalorder %s132, %s148
    %p150 = scmp.eq.s32.totalorder %s19, 0
    %p151 = por %p149, %p150
    %s152 = ssub.s32 %s20, %s32
    %s153 = ssub.s32 %s21, %s28
    %s154 = sor.u32 %s152, %s153
    %p155 = scmp.eq.s32.totalorder %s154, 0
    %s157 = sadd.s32 %s156, 1
    %s158 = scalar_select %p155, %s156, %s157
    %p161 = pneg %p155
    %p162 = scmp.eq.s32.totalorder %s13, 1
    %p163 = por %p161, %p162
    %p164 = scmp.ne.s32.totalorder %s156, %s159
    %p165 = scmp.eq.s32.totalorder %s13, 0
    %p166 = por %p164, %p165
    %p167 = scmp.ne.s32.totalorder %s156, %s159
    %p168 = scmp.eq.s32.totalorder %s18, 1
    %p169 = por %p167, %p168
    %p170 = scmp.ne.s32.totalorder %s159, %s160
    %p171 = scmp.eq.s32.totalorder %s18, 0
    %p172 = por %p170, %p171
    %p173 = scmp.ne.s32.totalorder %s159, %s160
    %p174 = scmp.eq.s32.totalorder %s19, 1
    %p175 = por %p173, %p174
    %p177 = scmp.ne.s32.totalorder %s160, %s176
    %p178 = scmp.eq.s32.totalorder %s19, 0
    %p179 = por %p177, %p178
    %s180 = ssub.s32 %s20, %s32
    %s181 = ssub.s32 %s21, %s28
    %s182 = sor.u32 %s180, %s181
    %p183 = scmp.eq.s32.totalorder %s182, 0
    %s185 = sadd.s32 %s184, 1
    %s186 = scalar_select %p183, %s184, %s185
    %p189 = pneg %p183
    %p190 = scmp.eq.s32.totalorder %s13, 1
    %p191 = por %p189, %p190
    %p192 = scmp.ne.s32.totalorder %s184, %s187
    %p193 = scmp.eq.s32.totalorder %s13, 0
    %p194 = por %p192, %p193
    %p195 = scmp.ne.s32.totalorder %s184, %s187
    %p196 = scmp.eq.s32.totalorder %s18, 1
    %p197 = por %p195, %p196
    %p198 = scmp.ne.s32.totalorder %s187, %s188
    %p199 = scmp.eq.s32.totalorder %s18, 0
    %p200 = por %p198, %p199
    %p201 = scmp.ne.s32.totalorder %s187, %s188
    %p202 = scmp.eq.s32.totalorder %s19, 1
    %p203 = por %p201, %p202
    %p205 = scmp.ne.s32.totalorder %s188, %s204
    %p206 = scmp.eq.s32.totalorder %s19, 0
    %p207 = por %p205, %p206
    %p208 = scmp.le.s32.totalorder 1, %s13
    %p209 = scmp.lt.s32.totalorder %s13, 3
    %p210 = pnand %p208, %p209
    %p211 = pneg %p210
    // Predicated region
    $region9: #{conv_block_forward.2} parent=5 // pred_check
      _
    $region10: #{conv_block_forward.2} parent=5 // pred_check_branch
      %213 = sbr.rel (%p210) target = $region12
    $region11: #{conv_block_forward.2} parent=5 // pred_region
      %s214 = ssub.s32 %s13, 1
      // Predicated region
      $region13: #{conv_block_forward.2} parent=11 // pred_check
        %p215 = pneg %p74
      $region14: #{conv_block_forward.2} parent=11 // pred_check_branch
        %217 = sbr.rel (%p215) target = $region16
      $region15: #{conv_block_forward.2} parent=11 // pred_region
        _
      $region16: #{conv_block_forward.2} parent=11 // pred_fallthru
        _
      // Predicated region
      $region17: #{conv_block_forward.2} parent=11 // pred_check
        %p218 = pneg %p95
      $region18: #{conv_block_forward.2} parent=11 // pred_check_branch
        %220 = sbr.rel (%p218) target = $region20
      $region19: #{conv_block_forward.2} parent=11 // pred_region
        _
      $region20: #{conv_block_forward.2} parent=11 // pred_fallthru
        _
      // Predicated region
      $region21: #{conv_block_forward.2} parent=11 // pred_check
        %p221 = pneg %p116
      $region22: #{conv_block_forward.2} parent=11 // pred_check_branch
        %223 = sbr.rel (%p221) target = $region24
      $region23: #{conv_block_forward.2} parent=11 // pred_region
        _
      $region24: #{conv_block_forward.2} parent=11 // pred_fallthru
        _
    $region12: #{conv_block_forward.2} parent=5 // pred_fallthru
      _
    %p224 = scmp.lt.s32.totalorder %s13, 2
    // Predicated region
    $region25: #{conv_block_forward.2} parent=5 // pred_check
      %p225 = pneg %p224
    $region26: #{conv_block_forward.2} parent=5 // pred_check_branch
      %227 = sbr.rel (%p225) target = $region28
    $region27: #{conv_block_forward.2} parent=5 // pred_region
      // Predicated region
      $region29: #{conv_block_forward.2} parent=27 // pred_check
        %p228 = pneg %p47
      $region30: #{conv_block_forward.2} parent=27 // pred_check_branch
        %230 = sbr.rel (%p228) target = $region32
      $region31: #{conv_block_forward.2} parent=27 // pred_region
        %p231 = scmp.lt.s32.totalorder %s20, 1
        %s232 = scalar_select %p231, %s20, 1
        %p233 = scmp.lt.s32.totalorder %s21, 0
        %s234 = scalar_select %p233, %s21, 0
        %s235 = smul.addr %s234, 24
        %s236 = smul.addr %s232, 24
        %s237 = sadd.s32 %s235, %s236
        %s238 = smul.addr %s237, 4
        %s239 = scalar_lea.vmem %s0, %s238
      $region32: #{conv_block_forward.2} parent=27 // pred_fallthru
        _
    $region28: #{conv_block_forward.2} parent=5 // pred_fallthru
      _
    %p240 = scmp.le.s32.totalorder 1, %s13
    %p241 = scmp.lt.s32.totalorder %s13, 3
    %p242 = pnand %p240, %p241
    %p243 = pneg %p242
    // Predicated region
    $region33: #{conv_block_forward.2} parent=5 // pred_check
      _
    $region34: #{conv_block_forward.2} parent=5 // pred_check_branch
      %245 = sbr.rel (%p242) target = $region36
    $region35: #{conv_block_forward.2} parent=5 // pred_region
      %s246 = ssub.s32 %s13, 1
      %p247 = scmp.lt.s32.totalorder %s22, 1
      %s248 = scalar_select %p247, %s22, 1
      %p249 = scmp.lt.s32.totalorder %s23, 0
      %s250 = scalar_select %p249, %s23, 0
      %s251 = smul.addr %s250, 24
      %s252 = smul.addr %s248, 24
      %s253 = sadd.s32 %s251, %s252
      %s254 = smul.addr %s253, 4
      %s255 = scalar_lea.vmem %s0, %s254
      %p256 = pneg %p53
      %p257 = pneg %p50
      %p258 = pneg %p74
      %p259 = pneg %p71
      %p260 = pneg %p95
      %p261 = pneg %p92
      %p262 = pneg %p116
      %p263 = pneg %p113
      %p264 = pneg %p144
      %p265 = pneg %p141
      %p266 = scmp.lt.s32.totalorder %s22, 1
      %s267 = scalar_select %p266, %s22, 1
      %p268 = scmp.lt.s32.totalorder %s23, 0
      %s269 = scalar_select %p268, %s23, 0
      %s270 = smul.addr %s269, 12
      %s271 = smul.addr %s267, 12
      %s272 = sadd.s32 %s270, %s271
      %s273 = smul.addr %s272, 4
      %s274 = scalar_lea.vmem %s4, %s273
      %p275 = pneg %p172
      %p276 = pneg %p169
      %p277 = scmp.lt.s32.totalorder %s22, 1
      %s278 = scalar_select %p277, %s22, 1
      %p279 = scmp.lt.s32.totalorder %s23, 0
      %s280 = scalar_select %p279, %s23, 0
      %s281 = smul.addr %s280, 4
      %s282 = smul.addr %s278, 4
      %s283 = sadd.s32 %s281, %s282
      %s284 = smul.addr %s283, 8
      %s285 = scalar_lea.vmem %s5, %s284
      %p286 = pneg %p200
      %p287 = pneg %p197
      %p288 = scmp.lt.s32.totalorder %s22, 1
      %s289 = scalar_select %p288, %s22, 1
      %p290 = scmp.lt.s32.totalorder %s23, 0
      %s291 = scalar_select %p290, %s23, 0
      %s292 = smul.addr %s291, 4
      %s293 = smul.addr %s289, 4
      %s294 = sadd.s32 %s292, %s293
      %s295 = smul.addr %s294, 8
      %s296 = scalar_lea.vmem %s6, %s295
      %p297 = scmp.lt.s32.totalorder %s22, 1
      %s298 = scalar_select %p297, %s22, 1
      %p299 = scmp.lt.s32.totalorder %s23, 0
      %s300 = scalar_select %p299, %s23, 0
      %s301 = smul.addr %s300, 24
      %s302 = smul.addr %s298, 24
      %s303 = sadd.s32 %s301, %s302
      %s304 = smul.addr %s303, 4
      %s305 = scalar_lea.vmem %s0, %s304
      %p306 = scmp.lt.s32.totalorder %s22, 1
      %s307 = scalar_select %p306, %s22, 1
      %p308 = scmp.lt.s32.totalorder %s23, 0
      %s309 = scalar_select %p308, %s23, 0
      %s310 = smul.addr %s309, 12
      %s311 = smul.addr %s307, 12
      %s312 = sadd.s32 %s310, %s311
      %s313 = smul.addr %s312, 4
      %s314 = scalar_lea.vmem %s4, %s313
      %p315 = scmp.lt.s32.totalorder %s22, 1
      %s316 = scalar_select %p315, %s22, 1
      %p317 = scmp.lt.s32.totalorder %s23, 0
      %s318 = scalar_select %p317, %s23, 0
      %s319 = smul.addr %s318, 4
      %s320 = smul.addr %s316, 4
      %s321 = sadd.s32 %s319, %s320
      %s322 = smul.addr %s321, 8
      %s323 = scalar_lea.vmem %s5, %s322
      %p324 = scmp.lt.s32.totalorder %s22, 1
      %s325 = scalar_select %p324, %s22, 1
      %p326 = scmp.lt.s32.totalorder %s23, 0
      %s327 = scalar_select %p326, %s23, 0
      %s328 = smul.addr %s327, 4
      %s329 = smul.addr %s325, 4
      %s330 = sadd.s32 %s328, %s329
      %s331 = smul.addr %s330, 8
      %s332 = scalar_lea.vmem %s6, %s331
      %v334 = vld [vmem:[%s305] sm:$0xff]
      %v335 = vld [vmem:[%s305 + $0x8] sm:$0xf]
      %v336 = vld [vmem:[%s305 + $0xc] sm:$0xff]
      %v337 = vld [vmem:[%s305 + $0x14] sm:$0xf]
      %v338 = vld [vmem:[%s305 + $0x18] sm:$0xff]
      %v339 = vld [vmem:[%s305 + $0x20] sm:$0xf]
      %v340 = vld [vmem:[%s305 + $0x24] sm:$0xff]
      %v341 = vld [vmem:[%s305 + $0x2c] sm:$0xf]
      %v342 = vld [vmem:[%s305 + $0x30] sm:$0xff]
      %v343 = vld [vmem:[%s305 + $0x38] sm:$0xf]
      %v344 = vld [vmem:[%s305 + $0x3c] sm:$0xff]
      %v345 = vld [vmem:[%s305 + $0x44] sm:$0xf]
      %v346 = vld [vmem:[%s305 + $0x48] sm:$0xff]
      %v347 = vld [vmem:[%s305 + $0x50] sm:$0xf]
      %v348 = vld [vmem:[%s305 + $0x54] sm:$0xff]
      %v349 = vld [vmem:[%s305 + $0x5c] sm:$0xf]
      %v350 = vld [vmem:[%s1] sm:$0xf]
      %v351 = vld [vmem:[%s1 + $0x4] sm:$0xf]
      %v352 = vld [vmem:[%s1 + $0x8] sm:$0xf]
      %v353 = vld [vmem:[%s1 + $0xc] sm:$0xf]
      %s354 = scalar_lea.vmem %s1, 16
      %v355 = vld [vmem:[%s354] sm:$0xf]
      %v356 = vld [vmem:[%s354 + $0x4] sm:$0xf]
      %v357 = vld [vmem:[%s354 + $0x8] sm:$0xf]
      %v358 = vld [vmem:[%s354 + $0xc] sm:$0xf]
      %v363 = vunpack.c.l.b16 %v355
      %v364 = vunpack.c.l.b16 %v356
      %v365 = vunpack.c.l.b16 %v357
      %v366 = vunpack.c.l.b16 %v358
      %v367 = vpack.c.b16 %v364, %v363
      %v368 = vpack.c.b16 %v366, %v365
      %v385 = vunpack.c.l.b16 %v334
      %v386 = vunpack.c.h.b16 %v334
      %v387 = vunpack.c.l.b16 %v335
      %v388 = vunpack.c.l.b16 %v336
      %v389 = vunpack.c.h.b16 %v336
      %v390 = vunpack.c.l.b16 %v337
      %v391 = vunpack.c.l.b16 %v338
      %v392 = vunpack.c.h.b16 %v338
      %v393 = vunpack.c.l.b16 %v339
      %v394 = vunpack.c.l.b16 %v340
      %v395 = vunpack.c.h.b16 %v340
      %v396 = vunpack.c.l.b16 %v341
      %v397 = vunpack.c.l.b16 %v342
      %v398 = vunpack.c.h.b16 %v342
      %v399 = vunpack.c.l.b16 %v343
      %v400 = vunpack.c.l.b16 %v344
      %v401 = vunpack.c.h.b16 %v344
      %v402 = vunpack.c.l.b16 %v345
      %v403 = vunpack.c.l.b16 %v346
      %v404 = vunpack.c.h.b16 %v346
      %v405 = vunpack.c.l.b16 %v347
      %v406 = vunpack.c.l.b16 %v348
      %v407 = vunpack.c.h.b16 %v348
      %v408 = vunpack.c.l.b16 %v349
      %v409 = vpack.c.b16 %v388, %v385
      %v410 = vpack.c.b16 %v389, %v386
      %v411 = vpack.c.b16 %v390, %v387
      %v412 = vpack.c.b16 %v394, %v391
      %v413 = vpack.c.b16 %v395, %v392
      %v414 = vpack.c.b16 %v396, %v393
      %v415 = vpack.c.b16 %v400, %v397
      %v416 = vpack.c.b16 %v401, %v398
      %v417 = vpack.c.b16 %v402, %v399
      %v418 = vpack.c.b16 %v406, %v403
      %v419 = vpack.c.b16 %v407, %v404
      %v420 = vpack.c.b16 %v408, %v405
      %421 = vrot.lane.b32.xlu0 %v409, 110
      %v422 = vpop.permute.xlu0 %421
      %423 = vrot.lane.b32.xlu0 %v410, 110
      %v424 = vpop.permute.xlu0 %423
      %425 = vrot.lane.b32.xlu0 %v411, 110
      %v426 = vpop.permute.xlu0 %425
      %427 = vrot.lane.b32.xlu0 %v412, 110
      %v428 = vpop.permute.xlu0 %427
      %429 = vrot.lane.b32.xlu0 %v413, 110
      %v430 = vpop.permute.xlu0 %429
      %431 = vrot.lane.b32.xlu0 %v414, 110
      %v432 = vpop.permute.xlu0 %431
      %433 = vrot.lane.b32.xlu0 %v415, 110
      %v434 = vpop.permute.xlu0 %433
      %435 = vrot.lane.b32.xlu0 %v416, 110
      %v436 = vpop.permute.xlu0 %435
      %437 = vrot.lane.b32.xlu0 %v417, 110
      %v438 = vpop.permute.xlu0 %437
      %439 = vrot.lane.b32.xlu0 %v418, 110
      %v440 = vpop.permute.xlu0 %439
      %441 = vrot.lane.b32.xlu0 %v419, 110
      %v442 = vpop.permute.xlu0 %441
      %443 = vrot.lane.b32.xlu0 %v420, 110
      %v444 = vpop.permute.xlu0 %443
      %vm445 = vcmask 900096
      %v446 = vsel %vm445, %v422, %v424
      %v447 = vsel %vm445, %v424, %v426
      %v448 = vsel %vm445, %v428, %v430
      %v449 = vsel %vm445, %v430, %v432
      %v450 = vsel %vm445, %v434, %v436
      %v451 = vsel %vm445, %v436, %v438
      %v452 = vsel %vm445, %v440, %v442
      %v453 = vsel %vm445, %v442, %v444
      %vm466 = vcmask 523264
      %v468 = vsel %vm466, %v367, 0
      %v471 = vsel %vm466, %v368, 0
      %473 = vmatprep.subr.bf16.mxu0 %v447
      %474 = vmatpush1.bf16.msra.mxu0 %v446
      %475 = vmatprep.subr.bf16.mxu0 %v449
      %476 = vmatpush1.bf16.msra.mxu0 %v448
      %477 = vmatprep.subr.bf16.mxu0 %v451
      %478 = vmatpush1.bf16.msra.mxu0 %v450
      %479 = vmatprep.subr.bf16.mxu0 %v453
      %480 = vmatpush1.bf16.msra.mxu0 %v452
      %481 = vmatprep.subr.bf16.mxu0 0
      %482 = vmatpush1.bf16.msra.mxu0 0
      %483 = vmatprep.subr.bf16.mxu0 0
      %484 = vmatpush1.bf16.msra.mxu0 0
      %485 = vmatprep.subr.bf16.mxu0 0
      %486 = vmatpush1.bf16.msra.mxu0 0
      %487 = vmatprep.subr.bf16.mxu0 0
      %488 = vmatpush1.bf16.msra.mxu0 0
      %489 = vmatprep.subr.bf16.mxu0 0
      %490 = vmatpush1.bf16.msra.mxu0 0
      %491 = vmatprep.subr.bf16.mxu0 0
      %492 = vmatpush1.bf16.msra.mxu0 0
      %493 = vmatprep.subr.bf16.mxu0 0
      %494 = vmatpush1.bf16.msra.mxu0 0
      %495 = vmatprep.subr.bf16.mxu0 0
      %496 = vmatpush1.bf16.msra.mxu0 0
      %497 = vmatprep.subr.bf16.mxu0 0
      %498 = vmatpush1.bf16.msra.mxu0 0
      %499 = vmatprep.subr.bf16.mxu0 0
      %500 = vmatpush1.bf16.msra.mxu0 0
      %501 = vmatprep.subr.bf16.mxu0 0
      %502 = vmatpush1.bf16.msra.mxu0 0
      %503 = vmatprep.subr.bf16.mxu0 0
      %504 = vmatpush1.bf16.msra.mxu0 0
      %505 = vmatprep.mubr.bf16.mxu0 0
      %506 = vmatmul.mubr.bf16.gmra.mrb[0].mxu0 %v468
      %v507 = vpop.f32.mrb[0].mxu0
      %v508 = vadd.f32 0.0, %v507
      %v509 = vpop.f32.mrb[0].mxu0
      %v510 = vadd.f32 0.0, %v509
      %v511 = vpop.f32.mrb[0].mxu0
      %v512 = vadd.f32 0.0, %v511
      %v513 = vpop.f32.mrb[0].mxu0
      %v514 = vadd.f32 0.0, %v513
      %515 = vmatprep.mubr.bf16.mxu0 0
      %516 = vmatmul.mubr.bf16.gmra.mrb[0].mxu0 %v471
      %v517 = vpop.f32.mrb[0].mxu0
      %v518 = vadd.f32 0.0, %v517
      %v519 = vpop.f32.mrb[0].mxu0
      %v520 = vadd.f32 0.0, %v519
      %v521 = vpop.f32.mrb[0].mxu0
      %v522 = vadd.f32 0.0, %v521
      %v523 = vpop.f32.mrb[0].mxu0
      %v524 = vadd.f32 0.0, %v523
      %525 = vdwg.mxu0
      %526 = vmatprep.subr.bf16.mxu0 0
      %527 = vmatpush1.bf16.msra.mxu0 %v426
      %528 = vmatprep.subr.bf16.mxu0 0
      %529 = vmatpush1.bf16.msra.mxu0 %v432
      %530 = vmatprep.subr.bf16.mxu0 0
      %531 = vmatpush1.bf16.msra.mxu0 %v438
      %532 = vmatprep.subr.bf16.mxu0 0
      %533 = vmatpush1.bf16.msra.mxu0 %v444
      %534 = vmatprep.subr.bf16.mxu0 0
      %535 = vmatpush1.bf16.msra.mxu0 0
      %536 = vmatprep.subr.bf16.mxu0 0
      %537 = vmatpush1.bf16.msra.mxu0 0
      %538 = vmatprep.subr.bf16.mxu0 0
      %539 = vmatpush1.bf16.msra.mxu0 0
      %540 = vmatprep.subr.bf16.mxu0 0
      %541 = vmatpush1.bf16.msra.mxu0 0
      %542 = vmatprep.subr.bf16.mxu0 0
      %543 = vmatpush1.bf16.msra.mxu0 0
      %544 = vmatprep.subr.bf16.mxu0 0
      %545 = vmatpush1.bf16.msra.mxu0 0
      %546 = vmatprep.subr.bf16.mxu0 0
      %547 = vmatpush1.bf16.msra.mxu0 0
      %548 = vmatprep.subr.bf16.mxu0 0
      %549 = vmatpush1.bf16.msra.mxu0 0
      %550 = vmatprep.subr.bf16.mxu0 0
      %551 = vmatpush1.bf16.msra.mxu0 0
      %552 = vmatprep.subr.bf16.mxu0 0
      %553 = vmatpush1.bf16.msra.mxu0 0
      %554 = vmatprep.subr.bf16.mxu0 0
      %555 = vmatpush1.bf16.msra.mxu0 0
      %556 = vmatprep.subr.bf16.mxu0 0
      %557 = vmatpush1.bf16.msra.mxu0 0
      %558 = vmatprep.mubr.bf16.mxu0 0
      %559 = vmatmul.mubr.bf16.gmra.mrb[0].mxu0 %v468
      %v560 = vpop.f32.mrb[0].mxu0
      %v561 = vadd.f32 0.0, %v560
      %v562 = vpop.f32.mrb[0].mxu0
      %v563 = vpop.f32.mrb[0].mxu0
      %v564 = vadd.f32 0.0, %v563
      %v565 = vpop.f32.mrb[0].mxu0
      %566 = vmatprep.mubr.bf16.mxu0 0
      %567 = vmatmul.mubr.bf16.gmra.mrb[0].mxu0 %v471
      %v568 = vpop.f32.mrb[0].mxu0
      %v569 = vadd.f32 0.0, %v568
      %v570 = vpop.f32.mrb[0].mxu0
      %v571 = vpop.f32.mrb[0].mxu0
      %v572 = vadd.f32 0.0, %v571
      %v573 = vpop.f32.mrb[0].mxu0
      %574 = vdwg.mxu0
      %v579 = vunpack.c.l.b16 %v350
      %v580 = vunpack.c.l.b16 %v351
      %v581 = vunpack.c.l.b16 %v352
      %v582 = vunpack.c.l.b16 %v353
      %v583 = vpack.c.b16 %v580, %v579
      %v584 = vpack.c.b16 %v582, %v581
      %v598 = vsel %vm466, %v583, 0
      %v601 = vsel %vm466, %v584, 0
      %603 = vmatprep.subr.bf16.mxu0 %v410
      %604 = vmatpush1.bf16.msra.mxu0 %v409
      %605 = vmatprep.subr.bf16.mxu0 %v413
      %606 = vmatpush1.bf16.msra.mxu0 %v412
      %607 = vmatprep.subr.bf16.mxu0 %v416
      %608 = vmatpush1.bf16.msra.mxu0 %v415
      %609 = vmatprep.subr.bf16.mxu0 %v419
      %610 = vmatpush1.bf16.msra.mxu0 %v418
      %611 = vmatprep.subr.bf16.mxu0 0
      %612 = vmatpush1.bf16.msra.mxu0 0
      %613 = vmatprep.subr.bf16.mxu0 0
      %614 = vmatpush1.bf16.msra.mxu0 0
      %615 = vmatprep.subr.bf16.mxu0 0
      %616 = vmatpush1.bf16.msra.mxu0 0
      %617 = vmatprep.subr.bf16.mxu0 0
      %618 = vmatpush1.bf16.msra.mxu0 0
      %619 = vmatprep.subr.bf16.mxu0 0
      %620 = vmatpush1.bf16.msra.mxu0 0
      %621 = vmatprep.subr.bf16.mxu0 0
      %622 = vmatpush1.bf16.msra.mxu0 0
      %623 = vmatprep.subr.bf16.mxu0 0
      %624 = vmatpush1.bf16.msra.mxu0 0
      %625 = vmatprep.subr.bf16.mxu0 0
      %626 = vmatpush1.bf16.msra.mxu0 0
      %627 = vmatprep.subr.bf16.mxu0 0
      %628 = vmatpush1.bf16.msra.mxu0 0
      %629 = vmatprep.subr.bf16.mxu0 0
      %630 = vmatpush1.bf16.msra.mxu0 0
      %631 = vmatprep.subr.bf16.mxu0 0
      %632 = vmatpush1.bf16.msra.mxu0 0
      %633 = vmatprep.subr.bf16.mxu0 0
      %634 = vmatpush1.bf16.msra.mxu0 0
      %635 = vmatprep.mubr.bf16.mxu0 0
      %636 = vmatmul.mubr.bf16.gmra.mrb[0].mxu0 %v598
      %v637 = vpop.f32.mrb[0].mxu0
      %v638 = vadd.f32 %v508, %v637
      %v639 = vpop.f32.mrb[0].mxu0
      %v640 = vadd.f32 %v510, %v639
      %v641 = vpop.f32.mrb[0].mxu0
      %v642 = vadd.f32 %v512, %v641
      %v643 = vpop.f32.mrb[0].mxu0
      %v644 = vadd.f32 %v514, %v643
      %645 = vmatprep.mubr.bf16.mxu0 0
      %646 = vmatmul.mubr.bf16.gmra.mrb[0].mxu0 %v601
      %v647 = vpop.f32.mrb[0].mxu0
      %v648 = vadd.f32 %v518, %v647
      %v649 = vpop.f32.mrb[0].mxu0
      %v650 = vadd.f32 %v520, %v649
      %v651 = vpop.f32.mrb[0].mxu0
      %v652 = vadd.f32 %v522, %v651
      %v653 = vpop.f32.mrb[0].mxu0
      %v654 = vadd.f32 %v524, %v653
      %655 = vdwg.mxu0
      %656 = vmatprep.subr.bf16.mxu0 0
      %657 = vmatpush1.bf16.msra.mxu0 %v411
      %658 = vmatprep.subr.bf16.mxu0 0
      %659 = vmatpush1.bf16.msra.mxu0 %v414
      %660 = vmatprep.subr.bf16.mxu0 0
      %661 = vmatpush1.bf16.msra.mxu0 %v417
      %662 = vmatprep.subr.bf16.mxu0 0
      %663 = vmatpush1.bf16.msra.mxu0 %v420
      %664 = vmatprep.subr.bf16.mxu0 0
      %665 = vmatpush1.bf16.msra.mxu0 0
      %666 = vmatprep.subr.bf16.mxu0 0
      %667 = vmatpush1.bf16.msra.mxu0 0
      %668 = vmatprep.subr.bf16.mxu0 0
      %669 = vmatpush1.bf16.msra.mxu0 0
      %670 = vmatprep.subr.bf16.mxu0 0
      %671 = vmatpush1.bf16.msra.mxu0 0
      %672 = vmatprep.subr.bf16.mxu0 0
      %673 = vmatpush1.bf16.msra.mxu0 0
      %674 = vmatprep.subr.bf16.mxu0 0
      %675 = vmatpush1.bf16.msra.mxu0 0
      %676 = vmatprep.subr.bf16.mxu0 0
      %677 = vmatpush1.bf16.msra.mxu0 0
      %678 = vmatprep.subr.bf16.mxu0 0
      %679 = vmatpush1.bf16.msra.mxu0 0
      %680 = vmatprep.subr.bf16.mxu0 0
      %681 = vmatpush1.bf16.msra.mxu0 0
      %682 = vmatprep.subr.bf16.mxu0 0
      %683 = vmatpush1.bf16.msra.mxu0 0
      %684 = vmatprep.subr.bf16.mxu0 0
      %685 = vmatpush1.bf16.msra.mxu0 0
      %686 = vmatprep.subr.bf16.mxu0 0
      %687 = vmatpush1.bf16.msra.mxu0 0
      %688 = vmatprep.mubr.bf16.mxu0 0
      %689 = vmatmul.mubr.bf16.gmra.mrb[0].mxu0 %v598
      %v690 = vpop.f32.mrb[0].mxu0
      %v691 = vadd.f32 %v561, %v690
      %v692 = vpop.f32.mrb[0].mxu0
      %v693 = vpop.f32.mrb[0].mxu0
      %v694 = vadd.f32 %v564, %v693
      %v695 = vpop.f32.mrb[0].mxu0
      %696 = vmatprep.mubr.bf16.mxu0 0
      %697 = vmatmul.mubr.bf16.gmra.mrb[0].mxu0 %v601
      %v698 = vpop.f32.mrb[0].mxu0
      %v699 = vadd.f32 %v569, %v698
      %v700 = vpop.f32.mrb[0].mxu0
      %v701 = vpop.f32.mrb[0].mxu0
      %v702 = vadd.f32 %v572, %v701
      %v703 = vpop.f32.mrb[0].mxu0
      %704 = vdwg.mxu0
      %s705 = scalar_lea.vmem %s1, 32
      %v706 = vld [vmem:[%s705] sm:$0xf]
      %v707 = vld [vmem:[%s705 + $0x4] sm:$0xf]
      %v708 = vld [vmem:[%s705 + $0x8] sm:$0xf]
      %v709 = vld [vmem:[%s705 + $0xc] sm:$0xf]
      %v714 = vunpack.c.l.b16 %v706
      %v715 = vunpack.c.l.b16 %v707
      %v716 = vunpack.c.l.b16 %v708
      %v717 = vunpack.c.l.b16 %v709
      %v718 = vpack.c.b16 %v715, %v714
      %v719 = vpack.c.b16 %v717, %v716
      %720 = vrot.lane.b32.xlu0 %v409, 92
      %v721 = vpop.permute.xlu0 %720
      %722 = vrot.lane.b32.xlu0 %v410, 92
      %v723 = vpop.permute.xlu0 %722
      %724 = vrot.lane.b32.xlu0 %v411, 92
      %v725 = vpop.permute.xlu0 %724
      %726 = vrot.lane.b32.xlu0 %v412, 92
      %v727 = vpop.permute.xlu0 %726
      %728 = vrot.lane.b32.xlu0 %v413, 92
      %v729 = vpop.permute.xlu0 %728
      %730 = vrot.lane.b32.xlu0 %v414, 92
      %v731 = vpop.permute.xlu0 %730
      %732 = vrot.lane.b32.xlu0 %v415, 92
      %v733 = vpop.permute.xlu0 %732
      %734 = vrot.lane.b32.xlu0 %v416, 92
      %v735 = vpop.permute.xlu0 %734
      %736 = vrot.lane.b32.xlu0 %v417, 92
      %v737 = vpop.permute.xlu0 %736
      %738 = vrot.lane.b32.xlu0 %v418, 92
      %v739 = vpop.permute.xlu0 %738
      %740 = vrot.lane.b32.xlu0 %v419, 92
      %v741 = vpop.permute.xlu0 %740
      %742 = vrot.lane.b32.xlu0 %v420, 92
      %v743 = vpop.permute.xlu0 %742
      %vm744 = vcmask 752640
      %v745 = vsel %vm744, %v721, %v723
      %v746 = vsel %vm744, %v723, %v725
      %v747 = vsel %vm744, %v727, %v729
      %v748 = vsel %vm744, %v729, %v731
      %v749 = vsel %vm744, %v733, %v735
      %v750 = vsel %vm744, %v735, %v737
      %v751 = vsel %vm744, %v739, %v741
      %v752 = vsel %vm744, %v741, %v743
      %v766 = vsel %vm466, %v718, 0
      %v769 = vsel %vm466, %v719, 0
      %771 = vmatprep.subr.bf16.mxu0 %v746
      %772 = vmatpush1.bf16.msra.mxu0 %v745
      %773 = vmatprep.subr.bf16.mxu0 %v748
      %774 = vmatpush1.bf16.msra.mxu0 %v747
      %775 = vmatprep.subr.bf16.mxu0 %v750
      %776 = vmatpush1.bf16.msra.mxu0 %v749
      %777 = vmatprep.subr.bf16.mxu0 %v752
      %778 = vmatpush1.bf16.msra.mxu0 %v751
      %779 = vmatprep.subr.bf16.mxu0 0
      %780 = vmatpush1.bf16.msra.mxu0 0
      %781 = vmatprep.subr.bf16.mxu0 0
      %782 = vmatpush1.bf16.msra.mxu0 0
      %783 = vmatprep.subr.bf16.mxu0 0
      %784 = vmatpush1.bf16.msra.mxu0 0
      %785 = vmatprep.subr.bf16.mxu0 0
      %786 = vmatpush1.bf16.msra.mxu0 0
      %787 = vmatprep.subr.bf16.mxu0 0
      %788 = vmatpush1.bf16.msra.mxu0 0
      %789 = vmatprep.subr.bf16.mxu0 0
      %790 = vmatpush1.bf16.msra.mxu0 0
      %791 = vmatprep.subr.bf16.mxu0 0
      %792 = vmatpush1.bf16.msra.mxu0 0
      %793 = vmatprep.subr.bf16.mxu0 0
      %794 = vmatpush1.bf16.msra.mxu0 0
      %795 = vmatprep.subr.bf16.mxu0 0
      %796 = vmatpush1.bf16.msra.mxu0 0
      %797 = vmatprep.subr.bf16.mxu0 0
      %798 = vmatpush1.bf16.msra.mxu0 0
      %799 = vmatprep.subr.bf16.mxu0 0
      %800 = vmatpush1.bf16.msra.mxu0 0
      %801 = vmatprep.subr.bf16.mxu0 0
      %802 = vmatpush1.bf16.msra.mxu0 0
      %803 = vmatprep.mubr.bf16.mxu0 0
      %804 = vmatmul.mubr.bf16.gmra.mrb[0].mxu0 %v766
      %v805 = vpop.f32.mrb[0].mxu0
      %v806 = vadd.f32 0.0, %v805
      %v807 = vpop.f32.mrb[0].mxu0
      %v808 = vadd.f32 0.0, %v807
      %v809 = vpop.f32.mrb[0].mxu0
      %v810 = vadd.f32 0.0, %v809
      %v811 = vpop.f32.mrb[0].mxu0
      %v812 = vadd.f32 0.0, %v811
      %813 = vmatprep.mubr.bf16.mxu0 0
      %814 = vmatmul.mubr.bf16.gmra.mrb[0].mxu0 %v769
      %v815 = vpop.f32.mrb[0].mxu0
      %v816 = vadd.f32 0.0, %v815
      %v817 = vpop.f32.mrb[0].mxu0
      %v818 = vadd.f32 0.0, %v817
      %v819 = vpop.f32.mrb[0].mxu0
      %v820 = vadd.f32 0.0, %v819
      %v821 = vpop.f32.mrb[0].mxu0
      %v822 = vadd.f32 0.0, %v821
      %823 = vdwg.mxu0
      %824 = vmatprep.subr.bf16.mxu0 0
      %825 = vmatpush1.bf16.msra.mxu0 %v725
      %826 = vmatprep.subr.bf16.mxu0 0
      %827 = vmatpush1.bf16.msra.mxu0 %v731
      %828 = vmatprep.subr.bf16.mxu0 0
      %829 = vmatpush1.bf16.msra.mxu0 %v737
      %830 = vmatprep.subr.bf16.mxu0 0
      %831 = vmatpush1.bf16.msra.mxu0 %v743
      %832 = vmatprep.subr.bf16.mxu0 0
      %833 = vmatpush1.bf16.msra.mxu0 0
      %834 = vmatprep.subr.bf16.mxu0 0
      %835 = vmatpush1.bf16.msra.mxu0 0
      %836 = vmatprep.subr.bf16.mxu0 0
      %837 = vmatpush1.bf16.msra.mxu0 0
      %838 = vmatprep.subr.bf16.mxu0 0
      %839 = vmatpush1.bf16.msra.mxu0 0
      %840 = vmatprep.subr.bf16.mxu0 0
      %841 = vmatpush1.bf16.msra.mxu0 0
      %842 = vmatprep.subr.bf16.mxu0 0
      %843 = vmatpush1.bf16.msra.mxu0 0
      %844 = vmatprep.subr.bf16.mxu0 0
      %845 = vmatpush1.bf16.msra.mxu0 0
      %846 = vmatprep.subr.bf16.mxu0 0
      %847 = vmatpush1.bf16.msra.mxu0 0
      %848 = vmatprep.subr.bf16.mxu0 0
      %849 = vmatpush1.bf16.msra.mxu0 0
      %850 = vmatprep.subr.bf16.mxu0 0
      %851 = vmatpush1.bf16.msra.mxu0 0
      %852 = vmatprep.subr.bf16.mxu0 0
      %853 = vmatpush1.bf16.msra.mxu0 0
      %854 = vmatprep.subr.bf16.mxu0 0
      %855 = vmatpush1.bf16.msra.mxu0 0
      %856 = vmatprep.mubr.bf16.mxu0 0
      %857 = vmatmul.mubr.bf16.gmra.mrb[0].mxu0 %v766
      %v858 = vpop.f32.mrb[0].mxu0
      %v859 = vadd.f32 0.0, %v858
      %v860 = vpop.f32.mrb[0].mxu0
      %v861 = vpop.f32.mrb[0].mxu0
      %v862 = vadd.f32 0.0, %v861
      %v863 = vpop.f32.mrb[0].mxu0
      %864 = vmatprep.mubr.bf16.mxu0 0
      %865 = vmatmul.mubr.bf16.gmra.mrb[0].mxu0 %v769
      %v866 = vpop.f32.mrb[0].mxu0
      %v867 = vadd.f32 0.0, %v866
      %v868 = vpop.f32.mrb[0].mxu0
      %v869 = vpop.f32.mrb[0].mxu0
      %v870 = vadd.f32 0.0, %v869
      %v871 = vpop.f32.mrb[0].mxu0
      %872 = vdwg.mxu0
      %v873 = vadd.f32 %v638, %v806
      %v874 = vadd.f32 %v640, %v808
      %v875 = vadd.f32 %v691, %v859
      %v876 = vadd.f32 %v642, %v810
      %v877 = vadd.f32 %v644, %v812
      %v878 = vadd.f32 %v694, %v862
      %v879 = vadd.f32 %v648, %v816
      %v880 = vadd.f32 %v650, %v818
      %v881 = vadd.f32 %v699, %v867
      %v882 = vadd.f32 %v652, %v820
      %v883 = vadd.f32 %v654, %v822
      %v884 = vadd.f32 %v702, %v870
      %v885 = vld [vmem:[%s3] sm:$0x7]
      %v887 = vlaneseq
      %v888 = vshrl.u32 %v887, 7
      %v889 = vsub.s32 0, %v888
      %v890 = vrot.slane %v885, %v889
      %v891 = vlaneseq
      %v892 = vshrl.u32 %v891, 7
      %v893 = vsub.s32 1, %v892
      %v894 = vrot.slane %v885, %v893
      %v895 = vlaneseq
      %v896 = vshrl.u32 %v895, 7
      %v897 = vsub.s32 2, %v896
      %v898 = vrot.slane %v885, %v897
      %v902 = vmul.f32 %v873, %v890
      %v903 = vmul.f32 %v874, %v894
      %v904 = vmul.f32 %v875, %v898
      %v905 = vmul.f32 %v876, %v890
      %v906 = vmul.f32 %v877, %v894
      %v907 = vmul.f32 %v878, %v898
      %v908 = vmul.f32 %v879, %v890
      %v909 = vmul.f32 %v880, %v894
      %v910 = vmul.f32 %v881, %v898
      %v911 = vmul.f32 %v882, %v890
      %v912 = vmul.f32 %v883, %v894
      %v913 = vmul.f32 %v884, %v898
      %v914 = vadd.f32 %v902, %v903
      %vm915 = vcmask 261120
      %v916 = vsel %vm915, %v904, 0.0
      %v917 = vadd.f32 %v914, %v916
      %918 = vadd.xlane.f32.xlu0 %v917
      %v919 = vpop.xlane.xlu0 %918
      %v920 = vadd.f32 %v905, %v906
      %v921 = vsel %vm915, %v907, 0.0
      %v922 = vadd.f32 %v920, %v921
      %923 = vadd.xlane.f32.xlu0 %v922
      %v924 = vpop.xlane.xlu0 %923
      %v925 = vadd.f32 %v908, %v909
      %v926 = vsel %vm915, %v910, 0.0
      %v927 = vadd.f32 %v925, %v926
      %928 = vadd.xlane.f32.xlu0 %v927
      %v929 = vpop.xlane.xlu0 %928
      %v930 = vadd.f32 %v911, %v912
      %v931 = vsel %vm915, %v913, 0.0
      %v932 = vadd.f32 %v930, %v931
      %933 = vadd.xlane.f32.xlu0 %v932
      %v934 = vpop.xlane.xlu0 %933
      %vm935 = vcmask 7168
      %936 = vst.msk [vmem:[%s323] sm:$0xff] %vm935, %v919
      %937 = vst.msk [vmem:[%s323 + $0x8] sm:$0xff] %vm935, %v924
      %938 = vst.msk [vmem:[%s323 + $0x10] sm:$0xff] %vm935, %v929
      %939 = vst.msk [vmem:[%s323 + $0x18] sm:$0xff] %vm935, %v934
      %v940 = vmul.f32 %v902, %v873
      %v941 = vmul.f32 %v903, %v874
      %v942 = vmul.f32 %v904, %v875
      %v943 = vmul.f32 %v905, %v876
      %v944 = vmul.f32 %v906, %v877
      %v945 = vmul.f32 %v907, %v878
      %v946 = vmul.f32 %v908, %v879
      %v947 = vmul.f32 %v909, %v880
      %v948 = vmul.f32 %v910, %v881
      %v949 = vmul.f32 %v911, %v882
      %v950 = vmul.f32 %v912, %v883
      %v951 = vmul.f32 %v913, %v884
      %v952 = vadd.f32 %v940, %v941
      %v953 = vsel %vm915, %v942, 0.0
      %v954 = vadd.f32 %v952, %v953
      %955 = vadd.xlane.f32.xlu0 %v954
      %v956 = vpop.xlane.xlu0 %955
      %v957 = vadd.f32 %v943, %v944
      %v958 = vsel %vm915, %v945, 0.0
      %v959 = vadd.f32 %v957, %v958
      %960 = vadd.xlane.f32.xlu0 %v959
      %v961 = vpop.xlane.xlu0 %960
      %v962 = vadd.f32 %v946, %v947
      %v963 = vsel %vm915, %v948, 0.0
      %v964 = vadd.f32 %v962, %v963
      %965 = vadd.xlane.f32.xlu0 %v964
      %v966 = vpop.xlane.xlu0 %965
      %v967 = vadd.f32 %v949, %v950
      %v968 = vsel %vm915, %v951, 0.0
      %v969 = vadd.f32 %v967, %v968
      %970 = vadd.xlane.f32.xlu0 %v969
      %v971 = vpop.xlane.xlu0 %970
      %972 = vst.msk [vmem:[%s332] sm:$0xff] %vm935, %v956
      %973 = vst.msk [vmem:[%s332 + $0x8] sm:$0xff] %vm935, %v961
      %974 = vst.msk [vmem:[%s332 + $0x10] sm:$0xff] %vm935, %v966
      %975 = vst.msk [vmem:[%s332 + $0x18] sm:$0xff] %vm935, %v971
      %v976 = vld [vmem:[%s2] sm:$0xff]
      %v977 = vld [vmem:[%s2 + $0x8] sm:$0xff]
      %v978 = vld [vmem:[%s2 + $0x10] sm:$0xff]
      %v979 = vld [vmem:[%s2 + $0x18] sm:$0xff]
      %981 = vset.pattern.permute.xlu0 0
      %982 = vperm.xlu0 %981, %v976
      %v983 = vpop.permute.xlu0 %982
      %986 = vset.pattern.permute.xlu0 0
      %987 = vperm.xlu0 %986, %v977
      %v988 = vpop.permute.xlu0 %987
      %991 = vset.pattern.permute.xlu0 0
      %992 = vperm.xlu0 %991, %v978
      %v993 = vpop.permute.xlu0 %992
      %996 = vset.pattern.permute.xlu0 0
      %997 = vperm.xlu0 %996, %v979
      %v998 = vpop.permute.xlu0 %997
      %v1000 = vadd.f32 %v873, %v983
      %v1001 = vadd.f32 %v874, %v983
      %v1002 = vadd.f32 %v875, %v983
      %v1003 = vadd.f32 %v876, %v988
      %v1004 = vadd.f32 %v877, %v988
      %v1005 = vadd.f32 %v878, %v988
      %v1006 = vadd.f32 %v879, %v993
      %v1007 = vadd.f32 %v880, %v993
      %v1008 = vadd.f32 %v881, %v993
      %v1009 = vadd.f32 %v882, %v998
      %v1010 = vadd.f32 %v883, %v998
      %v1011 = vadd.f32 %v884, %v998
      %v1012 = vpack.c.bf16 %v1003, %v1000
      %v1013 = vpack.c.bf16 %v1004, %v1001
      %v1014 = vpack.c.bf16 %v1005, %v1002
      %v1015 = vpack.c.bf16 %v1009, %v1006
      %v1016 = vpack.c.bf16 %v1010, %v1007
      %v1017 = vpack.c.bf16 %v1011, %v1008
      %v1024 = vunpack.c.l.b16 %v1012
      %v1025 = vunpack.c.l.b16 %v1013
      %v1026 = vunpack.c.l.b16 %v1014
      %v1027 = vunpack.c.h.b16 %v1012
      %v1028 = vunpack.c.h.b16 %v1013
      %v1029 = vunpack.c.h.b16 %v1014
      %v1030 = vunpack.c.l.b16 %v1015
      %v1031 = vunpack.c.l.b16 %v1016
      %v1032 = vunpack.c.l.b16 %v1017
      %v1033 = vunpack.c.h.b16 %v1015
      %v1034 = vunpack.c.h.b16 %v1016
      %v1035 = vunpack.c.h.b16 %v1017
      %v1036 = vpack.c.b16 %v1025, %v1024
      %v1037 = vpack.c.b16 %v1026, %v1026
      %v1038 = vpack.c.b16 %v1028, %v1027
      %v1039 = vpack.c.b16 %v1029, %v1029
      %v1040 = vpack.c.b16 %v1031, %v1030
      %v1041 = vpack.c.b16 %v1032, %v1032
      %v1042 = vpack.c.b16 %v1034, %v1033
      %v1043 = vpack.c.b16 %v1035, %v1035
      %1052 = vst [vmem:[%s314] sm:$0xff] %v1036
      %vm1053 = vcmask 257024
      %1054 = vst.msk [vmem:[%s314 + $0x8] sm:$0xf] %vm1053, %v1037
      %1055 = vst [vmem:[%s314 + $0xc] sm:$0xff] %v1038
      %1056 = vst.msk [vmem:[%s314 + $0x14] sm:$0xf] %vm1053, %v1039
      %1057 = vst [vmem:[%s314 + $0x18] sm:$0xff] %v1040
      %1058 = vst.msk [vmem:[%s314 + $0x20] sm:$0xf] %vm1053, %v1041
      %1059 = vst [vmem:[%s314 + $0x24] sm:$0xff] %v1042
      %1060 = vst.msk [vmem:[%s314 + $0x2c] sm:$0xf] %vm1053, %v1043
      %p1061 = scmp.lt.s32.totalorder %s22, 1
      %s1062 = scalar_select %p1061, %s22, 1
      %p1063 = scmp.lt.s32.totalorder %s23, 0
      %s1064 = scalar_select %p1063, %s23, 0
      %s1065 = smul.addr %s1064, 12
      %s1066 = smul.addr %s1062, 12
      %s1067 = sadd.s32 %s1065, %s1066
      %s1068 = smul.addr %s1067, 4
      %s1069 = scalar_lea.vmem %s4, %s1068
      %p1070 = scmp.lt.s32.totalorder %s22, 1
      %s1071 = scalar_select %p1070, %s22, 1
      %p1072 = scmp.lt.s32.totalorder %s23, 0
      %s1073 = scalar_select %p1072, %s23, 0
      %s1074 = smul.addr %s1073, 4
      %s1075 = smul.addr %s1071, 4
      %s1076 = sadd.s32 %s1074, %s1075
      %s1077 = smul.addr %s1076, 8
      %s1078 = scalar_lea.vmem %s5, %s1077
      %p1079 = scmp.lt.s32.totalorder %s22, 1
      %s1080 = scalar_select %p1079, %s22, 1
      %p1081 = scmp.lt.s32.totalorder %s23, 0
      %s1082 = scalar_select %p1081, %s23, 0
      %s1083 = smul.addr %s1082, 4
      %s1084 = smul.addr %s1080, 4
      %s1085 = sadd.s32 %s1083, %s1084
      %s1086 = smul.addr %s1085, 8
      %s1087 = scalar_lea.vmem %s6, %s1086
      // Predicated region
      $region37: #{conv_block_forward.2} parent=35 // pred_check
        %p1088 = pneg %p141
      $region38: #{conv_block_forward.2} parent=35 // pred_check_branch
        %1090 = sbr.rel (%p1088) target = $region40
      $region39: #{conv_block_forward.2} parent=35 // pred_region
        _
      $region40: #{conv_block_forward.2} parent=35 // pred_fallthru
        _
      // Predicated region
      $region41: #{conv_block_forward.2} parent=35 // pred_check
        %p1091 = pneg %p169
      $region42: #{conv_block_forward.2} parent=35 // pred_check_branch
        %1093 = sbr.rel (%p1091) target = $region44
      $region43: #{conv_block_forward.2} parent=35 // pred_region
        _
      $region44: #{conv_block_forward.2} parent=35 // pred_fallthru
        _
      // Predicated region
      $region45: #{conv_block_forward.2} parent=35 // pred_check
        %p1094 = pneg %p197
      $region46: #{conv_block_forward.2} parent=35 // pred_check_branch
        %1096 = sbr.rel (%p1094) target = $region48
      $region47: #{conv_block_forward.2} parent=35 // pred_region
        _
      $region48: #{conv_block_forward.2} parent=35 // pred_fallthru
        _
    $region36: #{conv_block_forward.2} parent=5 // pred_fallthru
      _
    %p1097 = scmp.le.s32.totalorder 2, %s13
    // Predicated region
    $region49: #{conv_block_forward.2} parent=5 // pred_check
      %p1098 = pneg %p1097
    $region50: #{conv_block_forward.2} parent=5 // pred_check_branch
      %1100 = sbr.rel (%p1098) target = $region52
    $region51: #{conv_block_forward.2} parent=5 // pred_region
      %s1101 = ssub.s32 %s13, 2
      // Predicated region
      $region53: #{conv_block_forward.2} parent=51 // pred_check
        %p1102 = pneg %p147
      $region54: #{conv_block_forward.2} parent=51 // pred_check_branch
        %1104 = sbr.rel (%p1102) target = $region56
      $region55: #{conv_block_forward.2} parent=51 // pred_region
        %p1105 = scmp.lt.s32.totalorder %s24, 1
        %s1106 = scalar_select %p1105, %s24, 1
        %p1107 = scmp.lt.s32.totalorder %s25, 0
        %s1108 = scalar_select %p1107, %s25, 0
        %s1109 = smul.addr %s1108, 12
        %s1110 = smul.addr %s1106, 12
        %s1111 = sadd.s32 %s1109, %s1110
        %s1112 = smul.addr %s1111, 4
        %s1113 = scalar_lea.vmem %s4, %s1112
      $region56: #{conv_block_forward.2} parent=51 // pred_fallthru
        _
      // Predicated region
      $region57: #{conv_block_forward.2} parent=51 // pred_check
        %p1114 = pneg %p175
      $region58: #{conv_block_forward.2} parent=51 // pred_check_branch
        %1116 = sbr.rel (%p1114) target = $region60
      $region59: #{conv_block_forward.2} parent=51 // pred_region
        %p1117 = scmp.lt.s32.totalorder %s24, 1
        %s1118 = scalar_select %p1117, %s24, 1
        %p1119 = scmp.lt.s32.totalorder %s25, 0
        %s1120 = scalar_select %p1119, %s25, 0
        %s1121 = smul.addr %s1120, 4
        %s1122 = smul.addr %s1118, 4
        %s1123 = sadd.s32 %s1121, %s1122
        %s1124 = smul.addr %s1123, 8
        %s1125 = scalar_lea.vmem %s5, %s1124
      $region60: #{conv_block_forward.2} parent=51 // pred_fallthru
        _
      // Predicated region
      $region61: #{conv_block_forward.2} parent=51 // pred_check
        %p1126 = pneg %p203
      $region62: #{conv_block_forward.2} parent=51 // pred_check_branch
        %1128 = sbr.rel (%p1126) target = $region64
      $region63: #{conv_block_forward.2} parent=51 // pred_region
        %p1129 = scmp.lt.s32.totalorder %s24, 1
        %s1130 = scalar_select %p1129, %s24, 1
        %p1131 = scmp.lt.s32.totalorder %s25, 0
        %s1132 = scalar_select %p1131, %s25, 0
        %s1133 = smul.addr %s1132, 4
        %s1134 = smul.addr %s1130, 4
        %s1135 = sadd.s32 %s1133, %s1134
        %s1136 = smul.addr %s1135, 8
        %s1137 = scalar_lea.vmem %s6, %s1136
      $region64: #{conv_block_forward.2} parent=51 // pred_fallthru
        _
    $region52: #{conv_block_forward.2} parent=5 // pred_fallthru
      _
  $region6: #{conv_block_forward.2} parent=0 // loop_footer
    %s17 = sadd.s32 1, %s13
  $region7: #{conv_block_forward.2} parent=0 // loop_footer_branch
    %12 = sbr.rel target = $region3
  $region8: #{conv_block_forward.2} parent=0 // loop_exit
    _

</llo_original>
